<compile_context>
chip_gen: v6e
topology: v6e:2x2x1
jax: 0.10.0
libtpu: 0.0.40
codegen_flags: <defaults>
</compile_context>

<pallas_src>
import functools
import math

import jax
import jax.numpy as jnp
from jax.experimental import pallas as pl
from jax.experimental.pallas import tpu as pltpu


# ----------------------------- fused Pallas kernel --------------------------

def _bert_layer_kernel(
    # inputs (per-batch block / per-layer block / whole small arrays)
    emb_ref, bias_ref, emb_g_ref, emb_b_ref,
    wqkv_ref, bqkv_ref, wo_ref, bo_ref, ln1g_ref, ln1b_ref,
    wi_ref, bi_ref, wo2_ref, bo2_ref, ln2g_ref, ln2b_ref,
    pool_w_ref, pool_b_ref, cls_w_ref, cls_b_ref,
    # output
    out_ref,
    # scratch: carried post-LN hidden state for the current batch element
    h_scr,
    *, num_layers, num_heads, head_dim, hidden, scale, eps):
  """One (batch, layer) grid step of the BERTClass forward."""
  l = pl.program_id(1)

  def mm(a, b):
    # MXU matmul: bf16 operands (casts are no-ops where already bf16),
    # f32 accumulation.
    return jax.lax.dot_general(
        a.astype(jnp.bfloat16), b.astype(jnp.bfloat16),
        (((a.ndim - 1,), (0,)), ((), ())),
        preferred_element_type=jnp.float32)

  def layernorm(x, g, b):           # all-f32 elementwise math
    mean = jnp.mean(x, axis=-1, keepdims=True)
    xc = x - mean
    var = jnp.mean(xc * xc, axis=-1, keepdims=True)
    return xc * jax.lax.rsqrt(var + eps) * g + b

  def gelu(x):
    # TODO(synk): tanh approximation of GELU (HF BERT uses erf-based GELU).
    return 0.5 * x * (1.0 + jnp.tanh(
        0.7978845608028654 * (x + 0.044715 * x * x * x)))

  # ---- layer 0: seed the carried hidden state from the embedding LayerNorm.
  @pl.when(l == 0)
  def _():
    x0 = layernorm(emb_ref[...], emb_g_ref[...], emb_b_ref[...])
    h_scr[...] = x0.astype(jnp.bfloat16)

  h_bf = h_scr[...]                              # (S, H) bf16, post-LN hidden
  h_f32 = h_bf.astype(jnp.float32)
  bias = bias_ref[...]                           # (1, S) additive key mask

  # ---- fused QKV projection: one MXU pass, 3H output lanes ----
  qkv = mm(h_bf, wqkv_ref[...]) + bqkv_ref[...]  # (S, 3H) f32
  qkv_bf = qkv.astype(jnp.bfloat16)              # single down-cast

  # ---- multi-head self-attention (per-batch SxS scores) ----
  ctx_heads = []
  for hd in range(num_heads):
    lo = hd * head_dim
    q = qkv_bf[:, lo:lo + head_dim]
    k = qkv_bf[:, hidden + lo:hidden + lo + head_dim]
    v = qkv_bf[:, 2 * hidden + lo:2 * hidden + lo + head_dim]
    s = jax.lax.dot_general(                     # q @ k.T, f32 accumulation
        q, k, (((1,), (1,)), ((), ())),
        preferred_element_type=jnp.float32) * scale + bias
    s = s - jnp.max(s, axis=-1, keepdims=True)
    p = jnp.exp(s)
    p = p * pl.reciprocal(jnp.sum(p, axis=-1, keepdims=True), approx=True)
    ctx_heads.append(mm(p, v))                   # (S, d) f32
  ctx = jnp.concatenate(ctx_heads, axis=-1).astype(jnp.bfloat16)   # (S, H)

  attn = mm(ctx, wo_ref[...]) + bo_ref[...]
  x1 = layernorm(attn + h_f32, ln1g_ref[...], ln1b_ref[...])
  x1_bf = x1.astype(jnp.bfloat16)

  # ---- feed-forward ----
  inter = gelu(mm(x1_bf, wi_ref[...]) + bi_ref[...])
  ffn = mm(inter.astype(jnp.bfloat16), wo2_ref[...]) + bo2_ref[...]
  x2 = layernorm(ffn + x1, ln2g_ref[...], ln2b_ref[...])

  h_scr[...] = x2.astype(jnp.bfloat16)           # carry to next layer

  # ---- final layer: pooler on [CLS] + classifier (lane-padded logits) ----
  @pl.when(l == num_layers - 1)
  def _():
    cls = x2[0:1, :]                                              # (1, H)
    pooled = jnp.tanh(mm(cls, pool_w_ref[...]) + pool_b_ref[...])  # (1, H)
    # (module-level Dropout(0.3): identity in eval mode)
    logits = mm(pooled, cls_w_ref[...]) + cls_b_ref[...]           # (1, PAD)
    out_ref[...] = jnp.broadcast_to(logits, out_ref.shape).astype(out_ref.dtype)


# ----------------------------- parameter prep -------------------------------

def init_params(key, cfg):
  H, I, L = cfg["hidden"], cfg["intermediate"], cfg["layers"]

  def normal(k, shape):
    return 0.02 * jax.random.normal(k, shape, dtype=jnp.float32)

  keys = iter(jax.random.split(key, 8 + 16 * L))
  p = {
      "word_emb": normal(next(keys), (cfg["vocab"], H)),
      "pos_emb": normal(next(keys), (cfg["max_pos"], H)),
      "tok_emb": normal(next(keys), (cfg["type_vocab"], H)),
      "emb_ln_g": jnp.ones((H,), jnp.float32),
      "emb_ln_b": jnp.zeros((H,), jnp.float32),
      "pool_w": normal(next(keys), (H, H)),
      "pool_b": jnp.zeros((H,), jnp.float32),
      "cls_w": normal(next(keys), (H, cfg["out_dim"])),
      "cls_b": jnp.zeros((cfg["out_dim"],), jnp.float32),
      "layers": [],
  }
  for _ in range(L):
    layer = {
        "wq": normal(next(keys), (H, H)), "bq": jnp.zeros((H,), jnp.float32),
        "wk": normal(next(keys), (H, H)), "bk": jnp.zeros((H,), jnp.float32),
        "wv": normal(next(keys), (H, H)), "bv": jnp.zeros((H,), jnp.float32),
        "wo": normal(next(keys), (H, H)), "bo": jnp.zeros((H,), jnp.float32),
        "ln1_g": jnp.ones((H,), jnp.float32), "ln1_b": jnp.zeros((H,), jnp.float32),
        "wi": normal(next(keys), (H, I)), "bi": jnp.zeros((I,), jnp.float32),
        "wo2": normal(next(keys), (I, H)), "bo2": jnp.zeros((H,), jnp.float32),
        "ln2_g": jnp.ones((H,), jnp.float32), "ln2_b": jnp.zeros((H,), jnp.float32),
    }
    p["layers"].append(layer)
  return p


def prepare_fused_params(params, cfg, pad_out):
  """Stack per-layer weights, fuse QKV, cast MXU weights to bf16, pad classifier."""
  out_dim = cfg["out_dim"]
  H = cfg["hidden"]
  wdt = jnp.bfloat16  # MXU operand dtype (accumulation stays f32 in-kernel)
  layers = params["layers"]

  wqkv = jnp.stack([jnp.concatenate([l["wq"], l["wk"], l["wv"]], axis=1)
                    for l in layers]).astype(wdt)                     # (L, H, 3H)
  bqkv = jnp.stack([jnp.concatenate([l["bq"], l["bk"], l["bv"]])[None, :]
                    for l in layers])                                 # (L, 1, 3H)
  wo = jnp.stack([l["wo"] for l in layers]).astype(wdt)
  bo = jnp.stack([l["bo"][None, :] for l in layers])
  ln1_g = jnp.stack([l["ln1_g"][None, :] for l in layers])
  ln1_b = jnp.stack([l["ln1_b"][None, :] for l in layers])
  wi = jnp.stack([l["wi"] for l in layers]).astype(wdt)
  bi = jnp.stack([l["bi"][None, :] for l in layers])
  wo2 = jnp.stack([l["wo2"] for l in layers]).astype(wdt)
  bo2 = jnp.stack([l["bo2"][None, :] for l in layers])
  ln2_g = jnp.stack([l["ln2_g"][None, :] for l in layers])
  ln2_b = jnp.stack([l["ln2_b"][None, :] for l in layers])

  cls_w = jnp.zeros((H, pad_out), jnp.float32).at[:, :out_dim].set(
      params["cls_w"]).astype(wdt)
  cls_b = jnp.zeros((1, pad_out), jnp.float32).at[0, :out_dim].set(
      params["cls_b"])

  return dict(
      emb_ln_g=params["emb_ln_g"][None, :], emb_ln_b=params["emb_ln_b"][None, :],
      wqkv=wqkv, bqkv=bqkv, wo=wo, bo=bo, ln1_g=ln1_g, ln1_b=ln1_b,
      wi=wi, bi=bi, wo2=wo2, bo2=bo2, ln2_g=ln2_g, ln2_b=ln2_b,
      pool_w=params["pool_w"].astype(wdt), pool_b=params["pool_b"][None, :],
      cls_w=cls_w, cls_b=cls_b)


# ----------------------------- forward (wrapper) ----------------------------

def bert_class_forward(params, ids, mask, token_type_ids, cfg):
  B, S = ids.shape
  H, nH, L, I = cfg["hidden"], cfg["heads"], cfg["layers"], cfg["intermediate"]
  assert H % nH == 0
  d = H // nH
  PAD = 128       # lane-padded classifier output width
  OUT_ROWS = 8    # sublane-padded output rows (row 0 holds the logits)

  fp = prepare_fused_params(params, cfg, pad_out=PAD)

  # --- embedding gathers (glue; everything else happens inside the kernel) ---
  we = jnp.take(params["word_emb"], ids, axis=0)                  # (B,S,H)
  pe = jnp.take(params["pos_emb"], jnp.arange(S), axis=0)[None]   # (1,S,H)
  te = jnp.take(params["tok_emb"], token_type_ids, axis=0)        # (B,S,H)
  emb = (we + pe + te).astype(jnp.float32)                        # (B,S,H)

  # HF-style additive key mask, per batch element only: (B, 1, S).
  bias = ((1.0 - mask.astype(jnp.float32)) * -10000.0)[:, None, :]

  kernel = functools.partial(
      _bert_layer_kernel,
      num_layers=L, num_heads=nH, head_dim=d, hidden=H,
      scale=1.0 / math.sqrt(d), eps=1e-12)

  # --- BlockSpecs: per-batch activations, per-layer streamed weights ---
  per_batch_3d = lambda b, l: (b, 0, 0)
  per_layer_3d = lambda b, l: (l, 0, 0)
  whole_2d = lambda b, l: (0, 0)

  in_specs = [
      pl.BlockSpec((None, S, H), per_batch_3d),        # emb
      pl.BlockSpec((None, 1, S), per_batch_3d),        # additive key mask
      pl.BlockSpec((1, H), whole_2d),                  # emb LN gamma
      pl.BlockSpec((1, H), whole_2d),                  # emb LN beta
      pl.BlockSpec((None, H, 3 * H), per_layer_3d),    # wqkv
      pl.BlockSpec((None, 1, 3 * H), per_layer_3d),    # bqkv
      pl.BlockSpec((None, H, H), per_layer_3d),        # wo
      pl.BlockSpec((None, 1, H), per_layer_3d),        # bo
      pl.BlockSpec((None, 1, H), per_layer_3d),        # ln1 gamma
      pl.BlockSpec((None, 1, H), per_layer_3d),        # ln1 beta
      pl.BlockSpec((None, H, I), per_layer_3d),        # wi
      pl.BlockSpec((None, 1, I), per_layer_3d),        # bi
      pl.BlockSpec((None, I, H), per_layer_3d),        # wo2
      pl.BlockSpec((None, 1, H), per_layer_3d),        # bo2
      pl.BlockSpec((None, 1, H), per_layer_3d),        # ln2 gamma
      pl.BlockSpec((None, 1, H), per_layer_3d),        # ln2 beta
      pl.BlockSpec((H, H), whole_2d),                  # pooler weight
      pl.BlockSpec((1, H), whole_2d),                  # pooler bias
      pl.BlockSpec((H, PAD), whole_2d),                # classifier weight (padded)
      pl.BlockSpec((1, PAD), whole_2d),                # classifier bias (padded)
  ]
  out_spec = pl.BlockSpec((None, OUT_ROWS, PAD), per_batch_3d)

  # --- advisory cost estimate ---
  flops_layer = (2 * S * H * 3 * H          # QKV projection
                 + 2 * nH * S * S * d       # scores
                 + 2 * nH * S * S * d       # P @ V
                 + 2 * S * H * H            # output projection
                 + 2 * S * H * I            # FFN in
                 + 2 * S * I * H)           # FFN out
  flops = int(B * (L * flops_layer + 2 * H * H + 2 * H * PAD))
  transcendentals = int(B * (L * (nH * S * S + S * I) + H))
  kernel_args = (emb, bias,
                 fp["emb_ln_g"], fp["emb_ln_b"],
                 fp["wqkv"], fp["bqkv"], fp["wo"], fp["bo"],
                 fp["ln1_g"], fp["ln1_b"],
                 fp["wi"], fp["bi"], fp["wo2"], fp["bo2"],
                 fp["ln2_g"], fp["ln2_b"],
                 fp["pool_w"], fp["pool_b"], fp["cls_w"], fp["cls_b"])
  bytes_accessed = int(sum(int(a.size) * a.dtype.itemsize for a in kernel_args)
                       + B * OUT_ROWS * PAD * 4)

  out_pad = pl.pallas_call(
      kernel,
      grid=(B, L),
      in_specs=in_specs,
      out_specs=out_spec,
      out_shape=jax.ShapeDtypeStruct((B, OUT_ROWS, PAD), jnp.float32),
      scratch_shapes=[pltpu.VMEM((S, H), jnp.bfloat16)],   # carried hidden state
      compiler_params=pltpu.CompilerParams(
          dimension_semantics=("parallel", "arbitrary"),
          vmem_limit_bytes=32 * 1024 * 1024),
      cost_estimate=pl.CostEstimate(flops=flops,
                                    transcendentals=transcendentals,
                                    bytes_accessed=bytes_accessed),
  )(*kernel_args)

  return out_pad[:, 0, :cfg["out_dim"]]


# --------------------------------- main --------------------------------------

if __name__ == "__main__":
  cfg = dict(vocab=100, hidden=64, heads=4, layers=2, intermediate=128,
             max_pos=32, type_vocab=2, out_dim=4)
  B, S = 2, 8

  key = jax.random.PRNGKey(0)
  k_param, k_ids = jax.random.split(key)
  params = init_params(k_param, cfg)

  ids = jax.random.randint(k_ids, (B, S), 0, cfg["vocab"], dtype=jnp.int32)
  token_type_ids = jnp.zeros((B, S), dtype=jnp.int32)
  mask = jnp.array([[1, 1, 1, 1, 1, 1, 1, 1],
                    [1, 1, 1, 1, 1, 1, 0, 0]], dtype=jnp.int32)

  out = bert_class_forward(params, ids, mask, token_type_ids, cfg)
  out = jax.block_until_ready(out)
  assert out.shape == (B, cfg["out_dim"]) and out.dtype == jnp.float32
  assert bool(jnp.all(jnp.isfinite(out)))
  print("KERNEL_OK")
</pallas_src>

<mosaic_0001>
module attributes {stable_mosaic.version = 11 : i64} {
  func.func @_bert_layer_kernel(%arg0: i32, %arg1: i32, %arg2: memref<1x8x64xf32, #tpu.memory_space<vmem>>, %arg3: memref<1x1x8xf32, #tpu.memory_space<vmem>>, %arg4: memref<1x64xf32, #tpu.memory_space<vmem>>, %arg5: memref<1x64xf32, #tpu.memory_space<vmem>>, %arg6: memref<1x64x192xbf16, #tpu.memory_space<vmem>>, %arg7: memref<1x1x192xf32, #tpu.memory_space<vmem>>, %arg8: memref<1x64x64xbf16, #tpu.memory_space<vmem>>, %arg9: memref<1x1x64xf32, #tpu.memory_space<vmem>>, %arg10: memref<1x1x64xf32, #tpu.memory_space<vmem>>, %arg11: memref<1x1x64xf32, #tpu.memory_space<vmem>>, %arg12: memref<1x64x128xbf16, #tpu.memory_space<vmem>>, %arg13: memref<1x1x128xf32, #tpu.memory_space<vmem>>, %arg14: memref<1x128x64xbf16, #tpu.memory_space<vmem>>, %arg15: memref<1x1x64xf32, #tpu.memory_space<vmem>>, %arg16: memref<1x1x64xf32, #tpu.memory_space<vmem>>, %arg17: memref<1x1x64xf32, #tpu.memory_space<vmem>>, %arg18: memref<64x64xbf16, #tpu.memory_space<vmem>>, %arg19: memref<1x64xf32, #tpu.memory_space<vmem>>, %arg20: memref<64x128xbf16, #tpu.memory_space<vmem>>, %arg21: memref<1x128xf32, #tpu.memory_space<vmem>>, %arg22: memref<1x8x128xf32, #tpu.memory_space<vmem>>, %arg23: memref<8x64xbf16, #tpu.memory_space<vmem>>) attributes {dimension_semantics = [#tpu.dimension_semantics<parallel>, #tpu.dimension_semantics<arbitrary>], iteration_bounds = array<i64: 2, 2>, scalar_prefetch = 0 : i64, scratch_operands = 1 : i64, tpu.core_type = #tpu.core_type<tc>, window_params = [{transform_indices = @transform_0, window_bounds = array<i64: 1, 8, 64>}, {transform_indices = @transform_1, window_bounds = array<i64: 1, 1, 8>}, {pipeline_mode = #tpu.pipeline_mode<synchronous>, transform_indices = @transform_2, window_bounds = array<i64: 1, 64>}, {pipeline_mode = #tpu.pipeline_mode<synchronous>, transform_indices = @transform_3, window_bounds = array<i64: 1, 64>}, {transform_indices = @transform_4, window_bounds = array<i64: 1, 64, 192>}, {transform_indices = @transform_5, window_bounds = array<i64: 1, 1, 192>}, {transform_indices = @transform_6, window_bounds = array<i64: 1, 64, 64>}, {transform_indices = @transform_7, window_bounds = array<i64: 1, 1, 64>}, {transform_indices = @transform_8, window_bounds = array<i64: 1, 1, 64>}, {transform_indices = @transform_9, window_bounds = array<i64: 1, 1, 64>}, {transform_indices = @transform_10, window_bounds = array<i64: 1, 64, 128>}, {transform_indices = @transform_11, window_bounds = array<i64: 1, 1, 128>}, {transform_indices = @transform_12, window_bounds = array<i64: 1, 128, 64>}, {transform_indices = @transform_13, window_bounds = array<i64: 1, 1, 64>}, {transform_indices = @transform_14, window_bounds = array<i64: 1, 1, 64>}, {transform_indices = @transform_15, window_bounds = array<i64: 1, 1, 64>}, {pipeline_mode = #tpu.pipeline_mode<synchronous>, transform_indices = @transform_16, window_bounds = array<i64: 64, 64>}, {pipeline_mode = #tpu.pipeline_mode<synchronous>, transform_indices = @transform_17, window_bounds = array<i64: 1, 64>}, {pipeline_mode = #tpu.pipeline_mode<synchronous>, transform_indices = @transform_18, window_bounds = array<i64: 64, 128>}, {pipeline_mode = #tpu.pipeline_mode<synchronous>, transform_indices = @transform_19, window_bounds = array<i64: 1, 128>}, {transform_indices = @transform_20, window_bounds = array<i64: 1, 8, 128>}]} {
    %c0_i32 = arith.constant 0 : i32
    %0 = arith.cmpi eq, %arg1, %c0_i32 : i32
    %1 = arith.extui %0 : i1 to i32
    %c0_i32_0 = arith.constant 0 : i32
    %2 = arith.cmpi ne, %1, %c0_i32_0 : i32
    scf.if %2 {
      %c0_81 = arith.constant 0 : index
      %c0_82 = arith.constant 0 : index
      %c0_83 = arith.constant 0 : index
      %188 = vector.load %arg2[%c0_81, %c0_82, %c0_83] : memref<1x8x64xf32, #tpu.memory_space<vmem>>, vector<1x8x64xf32>
      %189 = vector.shape_cast %188 : vector<1x8x64xf32> to vector<8x64xf32>
      %c0_84 = arith.constant 0 : index
      %c0_85 = arith.constant 0 : index
      %190 = vector.load %arg4[%c0_84, %c0_85] : memref<1x64xf32, #tpu.memory_space<vmem>>, vector<1x64xf32>
      %c0_86 = arith.constant 0 : index
      %c0_87 = arith.constant 0 : index
      %191 = vector.load %arg5[%c0_86, %c0_87] : memref<1x64xf32, #tpu.memory_space<vmem>>, vector<1x64xf32>
      %cst_88 = arith.constant dense<0.000000e+00> : vector<8xf32>
      %192 = vector.multi_reduction <add>, %189, %cst_88 [1] : vector<8x64xf32> to vector<8xf32>
      %193 = vector.shape_cast %192 : vector<8xf32> to vector<8x1xf32>
      %cst_89 = arith.constant 6.400000e+01 : f32
      %194 = vector.broadcast %cst_89 : f32 to vector<8x1xf32>
      %195 = arith.divf %193, %194 : vector<8x1xf32>
      %196 = vector.broadcast %195 : vector<8x1xf32> to vector<8x64xf32>
      %197 = arith.subf %189, %196 : vector<8x64xf32>
      %198 = arith.mulf %197, %197 : vector<8x64xf32>
      %cst_90 = arith.constant dense<0.000000e+00> : vector<8xf32>
      %199 = vector.multi_reduction <add>, %198, %cst_90 [1] : vector<8x64xf32> to vector<8xf32>
      %200 = vector.shape_cast %199 : vector<8xf32> to vector<8x1xf32>
      %cst_91 = arith.constant 6.400000e+01 : f32
      %201 = vector.broadcast %cst_91 : f32 to vector<8x1xf32>
      %202 = arith.divf %200, %201 : vector<8x1xf32>
      %cst_92 = arith.constant 9.99999996E-13 : f32
      %203 = vector.broadcast %cst_92 : f32 to vector<8x1xf32>
      %204 = arith.addf %202, %203 : vector<8x1xf32>
      %205 = math.rsqrt %204 : vector<8x1xf32>
      %206 = vector.broadcast %205 : vector<8x1xf32> to vector<8x64xf32>
      %207 = arith.mulf %197, %206 : vector<8x64xf32>
      %208 = vector.broadcast %190 : vector<1x64xf32> to vector<8x64xf32>
      %209 = arith.mulf %207, %208 : vector<8x64xf32>
      %210 = vector.broadcast %191 : vector<1x64xf32> to vector<8x64xf32>
      %211 = arith.addf %209, %210 : vector<8x64xf32>
      %212 = arith.truncf %211 : vector<8x64xf32> to vector<8x64xbf16>
      %c0_93 = arith.constant 0 : index
      %c0_94 = arith.constant 0 : index
      %213 = vector.load %arg23[%c0_93, %c0_94] : memref<8x64xbf16, #tpu.memory_space<vmem>>, vector<8x64xbf16>
      tpu.vector_store %arg23[%c0_93, %c0_94], %212 {strides = array<i32>} : memref<8x64xbf16, #tpu.memory_space<vmem>>, vector<8x64xbf16>,
    } else {
    }
    %c0 = arith.constant 0 : index
    %c0_1 = arith.constant 0 : index
    %3 = vector.load %arg23[%c0, %c0_1] : memref<8x64xbf16, #tpu.memory_space<vmem>>, vector<8x64xbf16>
    %4 = arith.extf %3 : vector<8x64xbf16> to vector<8x64xf32>
    %c0_2 = arith.constant 0 : index
    %c0_3 = arith.constant 0 : index
    %c0_4 = arith.constant 0 : index
    %5 = vector.load %arg3[%c0_2, %c0_3, %c0_4] : memref<1x1x8xf32, #tpu.memory_space<vmem>>, vector<1x1x8xf32>
    %6 = vector.shape_cast %5 : vector<1x1x8xf32> to vector<1x8xf32>
    %c0_5 = arith.constant 0 : index
    %c0_6 = arith.constant 0 : index
    %c0_7 = arith.constant 0 : index
    %7 = vector.load %arg6[%c0_5, %c0_6, %c0_7] : memref<1x64x192xbf16, #tpu.memory_space<vmem>>, vector<1x64x192xbf16>
    %8 = vector.shape_cast %7 : vector<1x64x192xbf16> to vector<64x192xbf16>
    %cst = arith.constant dense<0.000000e+00> : vector<8x192xf32>
    %9 = tpu.matmul %3, %8, %cst {dimension_numbers = #tpu.dot_dimension_numbers<[1], [0], [0], [1], [0, 0, 1, 1], [], []>} : vector<8x64xbf16>, vector<64x192xbf16>, vector<8x192xf32> -> vector<8x192xf32>
    %c0_8 = arith.constant 0 : index
    %c0_9 = arith.constant 0 : index
    %c0_10 = arith.constant 0 : index
    %10 = vector.load %arg7[%c0_8, %c0_9, %c0_10] : memref<1x1x192xf32, #tpu.memory_space<vmem>>, vector<1x1x192xf32>
    %11 = vector.shape_cast %10 : vector<1x1x192xf32> to vector<1x192xf32>
    %12 = vector.broadcast %11 : vector<1x192xf32> to vector<8x192xf32>
    %13 = arith.addf %9, %12 : vector<8x192xf32>
    %14 = arith.truncf %13 : vector<8x192xf32> to vector<8x192xbf16>
    %15 = vector.extract_strided_slice %14 {offsets = [0, 0], sizes = [8, 16], strides = [1, 1]} : vector<8x192xbf16> to vector<8x16xbf16>
    %16 = vector.extract_strided_slice %14 {offsets = [0, 64], sizes = [8, 16], strides = [1, 1]} : vector<8x192xbf16> to vector<8x16xbf16>
    %17 = vector.extract_strided_slice %14 {offsets = [0, 128], sizes = [8, 16], strides = [1, 1]} : vector<8x192xbf16> to vector<8x16xbf16>
    %cst_11 = arith.constant dense<0.000000e+00> : vector<8x8xf32>
    %18 = tpu.matmul %15, %16, %cst_11 {dimension_numbers = #tpu.dot_dimension_numbers<[1], [1], [0], [0], [0, 0, 1, 0], [], []>} : vector<8x16xbf16>, vector<8x16xbf16>, vector<8x8xf32> -> vector<8x8xf32>
    %cst_12 = arith.constant 2.500000e-01 : f32
    %19 = vector.broadcast %cst_12 : f32 to vector<8x8xf32>
    %20 = arith.mulf %18, %19 : vector<8x8xf32>
    %21 = vector.broadcast %6 : vector<1x8xf32> to vector<8x8xf32>
    %22 = arith.addf %20, %21 : vector<8x8xf32>
    %cst_13 = arith.constant dense<0xFF800000> : vector<8xf32>
    %23 = vector.multi_reduction <maximumf>, %22, %cst_13 [1] : vector<8x8xf32> to vector<8xf32>
    %24 = vector.shape_cast %23 : vector<8xf32> to vector<8x1xf32>
    %25 = vector.broadcast %24 : vector<8x1xf32> to vector<8x8xf32>
    %26 = arith.subf %22, %25 : vector<8x8xf32>
    %27 = math.exp %26 : vector<8x8xf32>
    %cst_14 = arith.constant dense<0.000000e+00> : vector<8xf32>
    %28 = vector.multi_reduction <add>, %27, %cst_14 [1] : vector<8x8xf32> to vector<8xf32>
    %29 = vector.shape_cast %28 : vector<8xf32> to vector<8x1xf32>
    %30 = tpu.reciprocal %29 {approx = true} : vector<8x1xf32> -> vector<8x1xf32>
    %31 = vector.broadcast %30 : vector<8x1xf32> to vector<8x8xf32>
    %32 = arith.mulf %27, %31 : vector<8x8xf32>
    %33 = arith.truncf %32 : vector<8x8xf32> to vector<8x8xbf16>
    %cst_15 = arith.constant dense<0.000000e+00> : vector<8x16xf32>
    %34 = tpu.matmul %33, %17, %cst_15 {dimension_numbers = #tpu.dot_dimension_numbers<[1], [0], [0], [1], [0, 0, 1, 1], [], []>} : vector<8x8xbf16>, vector<8x16xbf16>, vector<8x16xf32> -> vector<8x16xf32>
    %35 = vector.extract_strided_slice %14 {offsets = [0, 16], sizes = [8, 16], strides = [1, 1]} : vector<8x192xbf16> to vector<8x16xbf16>
    %36 = vector.extract_strided_slice %14 {offsets = [0, 80], sizes = [8, 16], strides = [1, 1]} : vector<8x192xbf16> to vector<8x16xbf16>
    %37 = vector.extract_strided_slice %14 {offsets = [0, 144], sizes = [8, 16], strides = [1, 1]} : vector<8x192xbf16> to vector<8x16xbf16>
    %cst_16 = arith.constant dense<0.000000e+00> : vector<8x8xf32>
    %38 = tpu.matmul %35, %36, %cst_16 {dimension_numbers = #tpu.dot_dimension_numbers<[1], [1], [0], [0], [0, 0, 1, 0], [], []>} : vector<8x16xbf16>, vector<8x16xbf16>, vector<8x8xf32> -> vector<8x8xf32>
    %cst_17 = arith.constant 2.500000e-01 : f32
    %39 = vector.broadcast %cst_17 : f32 to vector<8x8xf32>
    %40 = arith.mulf %38, %39 : vector<8x8xf32>
    %41 = vector.broadcast %6 : vector<1x8xf32> to vector<8x8xf32>
    %42 = arith.addf %40, %41 : vector<8x8xf32>
    %cst_18 = arith.constant dense<0xFF800000> : vector<8xf32>
    %43 = vector.multi_reduction <maximumf>, %42, %cst_18 [1] : vector<8x8xf32> to vector<8xf32>
    %44 = vector.shape_cast %43 : vector<8xf32> to vector<8x1xf32>
    %45 = vector.broadcast %44 : vector<8x1xf32> to vector<8x8xf32>
    %46 = arith.subf %42, %45 : vector<8x8xf32>
    %47 = math.exp %46 : vector<8x8xf32>
    %cst_19 = arith.constant dense<0.000000e+00> : vector<8xf32>
    %48 = vector.multi_reduction <add>, %47, %cst_19 [1] : vector<8x8xf32> to vector<8xf32>
    %49 = vector.shape_cast %48 : vector<8xf32> to vector<8x1xf32>
    %50 = tpu.reciprocal %49 {approx = true} : vector<8x1xf32> -> vector<8x1xf32>
    %51 = vector.broadcast %50 : vector<8x1xf32> to vector<8x8xf32>
    %52 = arith.mulf %47, %51 : vector<8x8xf32>
    %53 = arith.truncf %52 : vector<8x8xf32> to vector<8x8xbf16>
    %cst_20 = arith.constant dense<0.000000e+00> : vector<8x16xf32>
    %54 = tpu.matmul %53, %37, %cst_20 {dimension_numbers = #tpu.dot_dimension_numbers<[1], [0], [0], [1], [0, 0, 1, 1], [], []>} : vector<8x8xbf16>, vector<8x16xbf16>, vector<8x16xf32> -> vector<8x16xf32>
    %55 = vector.extract_strided_slice %14 {offsets = [0, 32], sizes = [8, 16], strides = [1, 1]} : vector<8x192xbf16> to vector<8x16xbf16>
    %56 = vector.extract_strided_slice %14 {offsets = [0, 96], sizes = [8, 16], strides = [1, 1]} : vector<8x192xbf16> to vector<8x16xbf16>
    %57 = vector.extract_strided_slice %14 {offsets = [0, 160], sizes = [8, 16], strides = [1, 1]} : vector<8x192xbf16> to vector<8x16xbf16>
    %cst_21 = arith.constant dense<0.000000e+00> : vector<8x8xf32>
    %58 = tpu.matmul %55, %56, %cst_21 {dimension_numbers = #tpu.dot_dimension_numbers<[1], [1], [0], [0], [0, 0, 1, 0], [], []>} : vector<8x16xbf16>, vector<8x16xbf16>, vector<8x8xf32> -> vector<8x8xf32>
    %cst_22 = arith.constant 2.500000e-01 : f32
    %59 = vector.broadcast %cst_22 : f32 to vector<8x8xf32>
    %60 = arith.mulf %58, %59 : vector<8x8xf32>
    %61 = vector.broadcast %6 : vector<1x8xf32> to vector<8x8xf32>
    %62 = arith.addf %60, %61 : vector<8x8xf32>
    %cst_23 = arith.constant dense<0xFF800000> : vector<8xf32>
    %63 = vector.multi_reduction <maximumf>, %62, %cst_23 [1] : vector<8x8xf32> to vector<8xf32>
    %64 = vector.shape_cast %63 : vector<8xf32> to vector<8x1xf32>
    %65 = vector.broadcast %64 : vector<8x1xf32> to vector<8x8xf32>
    %66 = arith.subf %62, %65 : vector<8x8xf32>
    %67 = math.exp %66 : vector<8x8xf32>
    %cst_24 = arith.constant dense<0.000000e+00> : vector<8xf32>
    %68 = vector.multi_reduction <add>, %67, %cst_24 [1] : vector<8x8xf32> to vector<8xf32>
    %69 = vector.shape_cast %68 : vector<8xf32> to vector<8x1xf32>
    %70 = tpu.reciprocal %69 {approx = true} : vector<8x1xf32> -> vector<8x1xf32>
    %71 = vector.broadcast %70 : vector<8x1xf32> to vector<8x8xf32>
    %72 = arith.mulf %67, %71 : vector<8x8xf32>
    %73 = arith.truncf %72 : vector<8x8xf32> to vector<8x8xbf16>
    %cst_25 = arith.constant dense<0.000000e+00> : vector<8x16xf32>
    %74 = tpu.matmul %73, %57, %cst_25 {dimension_numbers = #tpu.dot_dimension_numbers<[1], [0], [0], [1], [0, 0, 1, 1], [], []>} : vector<8x8xbf16>, vector<8x16xbf16>, vector<8x16xf32> -> vector<8x16xf32>
    %75 = vector.extract_strided_slice %14 {offsets = [0, 48], sizes = [8, 16], strides = [1, 1]} : vector<8x192xbf16> to vector<8x16xbf16>
    %76 = vector.extract_strided_slice %14 {offsets = [0, 112], sizes = [8, 16], strides = [1, 1]} : vector<8x192xbf16> to vector<8x16xbf16>
    %77 = vector.extract_strided_slice %14 {offsets = [0, 176], sizes = [8, 16], strides = [1, 1]} : vector<8x192xbf16> to vector<8x16xbf16>
    %cst_26 = arith.constant dense<0.000000e+00> : vector<8x8xf32>
    %78 = tpu.matmul %75, %76, %cst_26 {dimension_numbers = #tpu.dot_dimension_numbers<[1], [1], [0], [0], [0, 0, 1, 0], [], []>} : vector<8x16xbf16>, vector<8x16xbf16>, vector<8x8xf32> -> vector<8x8xf32>
    %cst_27 = arith.constant 2.500000e-01 : f32
    %79 = vector.broadcast %cst_27 : f32 to vector<8x8xf32>
    %80 = arith.mulf %78, %79 : vector<8x8xf32>
    %81 = vector.broadcast %6 : vector<1x8xf32> to vector<8x8xf32>
    %82 = arith.addf %80, %81 : vector<8x8xf32>
    %cst_28 = arith.constant dense<0xFF800000> : vector<8xf32>
    %83 = vector.multi_reduction <maximumf>, %82, %cst_28 [1] : vector<8x8xf32> to vector<8xf32>
    %84 = vector.shape_cast %83 : vector<8xf32> to vector<8x1xf32>
    %85 = vector.broadcast %84 : vector<8x1xf32> to vector<8x8xf32>
    %86 = arith.subf %82, %85 : vector<8x8xf32>
    %87 = math.exp %86 : vector<8x8xf32>
    %cst_29 = arith.constant dense<0.000000e+00> : vector<8xf32>
    %88 = vector.multi_reduction <add>, %87, %cst_29 [1] : vector<8x8xf32> to vector<8xf32>
    %89 = vector.shape_cast %88 : vector<8xf32> to vector<8x1xf32>
    %90 = tpu.reciprocal %89 {approx = true} : vector<8x1xf32> -> vector<8x1xf32>
    %91 = vector.broadcast %90 : vector<8x1xf32> to vector<8x8xf32>
    %92 = arith.mulf %87, %91 : vector<8x8xf32>
    %93 = arith.truncf %92 : vector<8x8xf32> to vector<8x8xbf16>
    %cst_30 = arith.constant dense<0.000000e+00> : vector<8x16xf32>
    %94 = tpu.matmul %93, %77, %cst_30 {dimension_numbers = #tpu.dot_dimension_numbers<[1], [0], [0], [1], [0, 0, 1, 1], [], []>} : vector<8x8xbf16>, vector<8x16xbf16>, vector<8x16xf32> -> vector<8x16xf32>
    %95 = tpu.concatenate %34, %54, %74, %94 in 1 : vector<8x16xf32>, vector<8x16xf32>, vector<8x16xf32>, vector<8x16xf32> -> vector<8x64xf32>
    %96 = arith.truncf %95 : vector<8x64xf32> to vector<8x64xbf16>
    %c0_31 = arith.constant 0 : index
    %c0_32 = arith.constant 0 : index
    %c0_33 = arith.constant 0 : index
    %97 = vector.load %arg8[%c0_31, %c0_32, %c0_33] : memref<1x64x64xbf16, #tpu.memory_space<vmem>>, vector<1x64x64xbf16>
    %98 = vector.shape_cast %97 : vector<1x64x64xbf16> to vector<64x64xbf16>
    %cst_34 = arith.constant dense<0.000000e+00> : vector<8x64xf32>
    %99 = tpu.matmul %96, %98, %cst_34 {dimension_numbers = #tpu.dot_dimension_numbers<[1], [0], [0], [1], [0, 0, 1, 1], [], []>} : vector<8x64xbf16>, vector<64x64xbf16>, vector<8x64xf32> -> vector<8x64xf32>
    %c0_35 = arith.constant 0 : index
    %c0_36 = arith.constant 0 : index
    %c0_37 = arith.constant 0 : index
    %100 = vector.load %arg9[%c0_35, %c0_36, %c0_37] : memref<1x1x64xf32, #tpu.memory_space<vmem>>, vector<1x1x64xf32>
    %101 = vector.shape_cast %100 : vector<1x1x64xf32> to vector<1x64xf32>
    %102 = vector.broadcast %101 : vector<1x64xf32> to vector<8x64xf32>
    %103 = arith.addf %99, %102 : vector<8x64xf32>
    %104 = arith.addf %103, %4 : vector<8x64xf32>
    %c0_38 = arith.constant 0 : index
    %c0_39 = arith.constant 0 : index
    %c0_40 = arith.constant 0 : index
    %105 = vector.load %arg10[%c0_38, %c0_39, %c0_40] : memref<1x1x64xf32, #tpu.memory_space<vmem>>, vector<1x1x64xf32>
    %106 = vector.shape_cast %105 : vector<1x1x64xf32> to vector<1x64xf32>
    %c0_41 = arith.constant 0 : index
    %c0_42 = arith.constant 0 : index
    %c0_43 = arith.constant 0 : index
    %107 = vector.load %arg11[%c0_41, %c0_42, %c0_43] : memref<1x1x64xf32, #tpu.memory_space<vmem>>, vector<1x1x64xf32>
    %108 = vector.shape_cast %107 : vector<1x1x64xf32> to vector<1x64xf32>
    %cst_44 = arith.constant dense<0.000000e+00> : vector<8xf32>
    %109 = vector.multi_reduction <add>, %104, %cst_44 [1] : vector<8x64xf32> to vector<8xf32>
    %110 = vector.shape_cast %109 : vector<8xf32> to vector<8x1xf32>
    %cst_45 = arith.constant 6.400000e+01 : f32
    %111 = vector.broadcast %cst_45 : f32 to vector<8x1xf32>
    %112 = arith.divf %110, %111 : vector<8x1xf32>
    %113 = vector.broadcast %112 : vector<8x1xf32> to vector<8x64xf32>
    %114 = arith.subf %104, %113 : vector<8x64xf32>
    %115 = arith.mulf %114, %114 : vector<8x64xf32>
    %cst_46 = arith.constant dense<0.000000e+00> : vector<8xf32>
    %116 = vector.multi_reduction <add>, %115, %cst_46 [1] : vector<8x64xf32> to vector<8xf32>
    %117 = vector.shape_cast %116 : vector<8xf32> to vector<8x1xf32>
    %cst_47 = arith.constant 6.400000e+01 : f32
    %118 = vector.broadcast %cst_47 : f32 to vector<8x1xf32>
    %119 = arith.divf %117, %118 : vector<8x1xf32>
    %cst_48 = arith.constant 9.99999996E-13 : f32
    %120 = vector.broadcast %cst_48 : f32 to vector<8x1xf32>
    %121 = arith.addf %119, %120 : vector<8x1xf32>
    %122 = math.rsqrt %121 : vector<8x1xf32>
    %123 = vector.broadcast %122 : vector<8x1xf32> to vector<8x64xf32>
    %124 = arith.mulf %114, %123 : vector<8x64xf32>
    %125 = vector.broadcast %106 : vector<1x64xf32> to vector<8x64xf32>
    %126 = arith.mulf %124, %125 : vector<8x64xf32>
    %127 = vector.broadcast %108 : vector<1x64xf32> to vector<8x64xf32>
    %128 = arith.addf %126, %127 : vector<8x64xf32>
    %129 = arith.truncf %128 : vector<8x64xf32> to vector<8x64xbf16>
    %c0_49 = arith.constant 0 : index
    %c0_50 = arith.constant 0 : index
    %c0_51 = arith.constant 0 : index
    %130 = vector.load %arg12[%c0_49, %c0_50, %c0_51] : memref<1x64x128xbf16, #tpu.memory_space<vmem>>, vector<1x64x128xbf16>
    %131 = vector.shape_cast %130 : vector<1x64x128xbf16> to vector<64x128xbf16>
    %cst_52 = arith.constant dense<0.000000e+00> : vector<8x128xf32>
    %132 = tpu.matmul %129, %131, %cst_52 {dimension_numbers = #tpu.dot_dimension_numbers<[1], [0], [0], [1], [0, 0, 1, 1], [], []>} : vector<8x64xbf16>, vector<64x128xbf16>, vector<8x128xf32> -> vector<8x128xf32>
    %c0_53 = arith.constant 0 : index
    %c0_54 = arith.constant 0 : index
    %c0_55 = arith.constant 0 : index
    %133 = vector.load %arg13[%c0_53, %c0_54, %c0_55] : memref<1x1x128xf32, #tpu.memory_space<vmem>>, vector<1x1x128xf32>
    %134 = vector.shape_cast %133 : vector<1x1x128xf32> to vector<1x128xf32>
    %135 = vector.broadcast %134 : vector<1x128xf32> to vector<8x128xf32>
    %136 = arith.addf %132, %135 : vector<8x128xf32>
    %cst_56 = arith.constant 5.000000e-01 : f32
    %137 = vector.broadcast %cst_56 : f32 to vector<8x128xf32>
    %138 = arith.mulf %137, %136 : vector<8x128xf32>
    %cst_57 = arith.constant 4.471500e-02 : f32
    %139 = vector.broadcast %cst_57 : f32 to vector<8x128xf32>
    %140 = arith.mulf %139, %136 : vector<8x128xf32>
    %141 = arith.mulf %140, %136 : vector<8x128xf32>
    %142 = arith.mulf %141, %136 : vector<8x128xf32>
    %143 = arith.addf %136, %142 : vector<8x128xf32>
    %cst_58 = arith.constant 0.797884583 : f32
    %144 = vector.broadcast %cst_58 : f32 to vector<8x128xf32>
    %145 = arith.mulf %144, %143 : vector<8x128xf32>
    %146 = math.tanh %145 : vector<8x128xf32>
    %cst_59 = arith.constant 1.000000e+00 : f32
    %147 = vector.broadcast %cst_59 : f32 to vector<8x128xf32>
    %148 = arith.addf %147, %146 : vector<8x128xf32>
    %149 = arith.mulf %138, %148 : vector<8x128xf32>
    %150 = arith.truncf %149 : vector<8x128xf32> to vector<8x128xbf16>
    %c0_60 = arith.constant 0 : index
    %c0_61 = arith.constant 0 : index
    %c0_62 = arith.constant 0 : index
    %151 = vector.load %arg14[%c0_60, %c0_61, %c0_62] : memref<1x128x64xbf16, #tpu.memory_space<vmem>>, vector<1x128x64xbf16>
    %152 = vector.shape_cast %151 : vector<1x128x64xbf16> to vector<128x64xbf16>
    %cst_63 = arith.constant dense<0.000000e+00> : vector<8x64xf32>
    %153 = tpu.matmul %150, %152, %cst_63 {dimension_numbers = #tpu.dot_dimension_numbers<[1], [0], [0], [1], [0, 0, 1, 1], [], []>} : vector<8x128xbf16>, vector<128x64xbf16>, vector<8x64xf32> -> vector<8x64xf32>
    %c0_64 = arith.constant 0 : index
    %c0_65 = arith.constant 0 : index
    %c0_66 = arith.constant 0 : index
    %154 = vector.load %arg15[%c0_64, %c0_65, %c0_66] : memref<1x1x64xf32, #tpu.memory_space<vmem>>, vector<1x1x64xf32>
    %155 = vector.shape_cast %154 : vector<1x1x64xf32> to vector<1x64xf32>
    %156 = vector.broadcast %155 : vector<1x64xf32> to vector<8x64xf32>
    %157 = arith.addf %153, %156 : vector<8x64xf32>
    %158 = arith.addf %157, %128 : vector<8x64xf32>
    %c0_67 = arith.constant 0 : index
    %c0_68 = arith.constant 0 : index
    %c0_69 = arith.constant 0 : index
    %159 = vector.load %arg16[%c0_67, %c0_68, %c0_69] : memref<1x1x64xf32, #tpu.memory_space<vmem>>, vector<1x1x64xf32>
    %160 = vector.shape_cast %159 : vector<1x1x64xf32> to vector<1x64xf32>
    %c0_70 = arith.constant 0 : index
    %c0_71 = arith.constant 0 : index
    %c0_72 = arith.constant 0 : index
    %161 = vector.load %arg17[%c0_70, %c0_71, %c0_72] : memref<1x1x64xf32, #tpu.memory_space<vmem>>, vector<1x1x64xf32>
    %162 = vector.shape_cast %161 : vector<1x1x64xf32> to vector<1x64xf32>
    %cst_73 = arith.constant dense<0.000000e+00> : vector<8xf32>
    %163 = vector.multi_reduction <add>, %158, %cst_73 [1] : vector<8x64xf32> to vector<8xf32>
    %164 = vector.shape_cast %163 : vector<8xf32> to vector<8x1xf32>
    %cst_74 = arith.constant 6.400000e+01 : f32
    %165 = vector.broadcast %cst_74 : f32 to vector<8x1xf32>
    %166 = arith.divf %164, %165 : vector<8x1xf32>
    %167 = vector.broadcast %166 : vector<8x1xf32> to vector<8x64xf32>
    %168 = arith.subf %158, %167 : vector<8x64xf32>
    %169 = arith.mulf %168, %168 : vector<8x64xf32>
    %cst_75 = arith.constant dense<0.000000e+00> : vector<8xf32>
    %170 = vector.multi_reduction <add>, %169, %cst_75 [1] : vector<8x64xf32> to vector<8xf32>
    %171 = vector.shape_cast %170 : vector<8xf32> to vector<8x1xf32>
    %cst_76 = arith.constant 6.400000e+01 : f32
    %172 = vector.broadcast %cst_76 : f32 to vector<8x1xf32>
    %173 = arith.divf %171, %172 : vector<8x1xf32>
    %cst_77 = arith.constant 9.99999996E-13 : f32
    %174 = vector.broadcast %cst_77 : f32 to vector<8x1xf32>
    %175 = arith.addf %173, %174 : vector<8x1xf32>
    %176 = math.rsqrt %175 : vector<8x1xf32>
    %177 = vector.broadcast %176 : vector<8x1xf32> to vector<8x64xf32>
    %178 = arith.mulf %168, %177 : vector<8x64xf32>
    %179 = vector.broadcast %160 : vector<1x64xf32> to vector<8x64xf32>
    %180 = arith.mulf %178, %179 : vector<8x64xf32>
    %181 = vector.broadcast %162 : vector<1x64xf32> to vector<8x64xf32>
    %182 = arith.addf %180, %181 : vector<8x64xf32>
    %183 = arith.truncf %182 : vector<8x64xf32> to vector<8x64xbf16>
    %c0_78 = arith.constant 0 : index
    %c0_79 = arith.constant 0 : index
    %184 = vector.load %arg23[%c0_78, %c0_79] : memref<8x64xbf16, #tpu.memory_space<vmem>>, vector<8x64xbf16>
    tpu.vector_store %arg23[%c0_78, %c0_79], %183 {strides = array<i32>} : memref<8x64xbf16, #tpu.memory_space<vmem>>, vector<8x64xbf16>,
    %c1_i32 = arith.constant 1 : i32
    %185 = arith.cmpi eq, %arg1, %c1_i32 : i32
    %186 = arith.extui %185 : i1 to i32
    %c0_i32_80 = arith.constant 0 : i32
    %187 = arith.cmpi ne, %186, %c0_i32_80 : i32
    scf.if %187 {
      %188 = vector.extract_strided_slice %182 {offsets = [0, 0], sizes = [1, 64], strides = [1, 1]} : vector<8x64xf32> to vector<1x64xf32>
      %c0_81 = arith.constant 0 : index
      %c0_82 = arith.constant 0 : index
      %189 = vector.load %arg18[%c0_81, %c0_82] : memref<64x64xbf16, #tpu.memory_space<vmem>>, vector<64x64xbf16>
      %190 = arith.truncf %188 : vector<1x64xf32> to vector<1x64xbf16>
      %cst_83 = arith.constant dense<0.000000e+00> : vector<1x64xf32>
      %191 = tpu.matmul %190, %189, %cst_83 {dimension_numbers = #tpu.dot_dimension_numbers<[1], [0], [0], [1], [0, 0, 1, 1], [], []>} : vector<1x64xbf16>, vector<64x64xbf16>, vector<1x64xf32> -> vector<1x64xf32>
      %c0_84 = arith.constant 0 : index
      %c0_85 = arith.constant 0 : index
      %192 = vector.load %arg19[%c0_84, %c0_85] : memref<1x64xf32, #tpu.memory_space<vmem>>, vector<1x64xf32>
      %193 = arith.addf %191, %192 : vector<1x64xf32>
      %194 = math.tanh %193 : vector<1x64xf32>
      %c0_86 = arith.constant 0 : index
      %c0_87 = arith.constant 0 : index
      %195 = vector.load %arg20[%c0_86, %c0_87] : memref<64x128xbf16, #tpu.memory_space<vmem>>, vector<64x128xbf16>
      %196 = arith.truncf %194 : vector<1x64xf32> to vector<1x64xbf16>
      %cst_88 = arith.constant dense<0.000000e+00> : vector<1x128xf32>
      %197 = tpu.matmul %196, %195, %cst_88 {dimension_numbers = #tpu.dot_dimension_numbers<[1], [0], [0], [1], [0, 0, 1, 1], [], []>} : vector<1x64xbf16>, vector<64x128xbf16>, vector<1x128xf32> -> vector<1x128xf32>
      %c0_89 = arith.constant 0 : index
      %c0_90 = arith.constant 0 : index
      %198 = vector.load %arg21[%c0_89, %c0_90] : memref<1x128xf32, #tpu.memory_space<vmem>>, vector<1x128xf32>
      %199 = arith.addf %197, %198 : vector<1x128xf32>
      %200 = vector.shape_cast %199 : vector<1x128xf32> to vector<1x128xf32>
      %201 = vector.broadcast %200 : vector<1x128xf32> to vector<8x128xf32>
      %c0_91 = arith.constant 0 : index
      %c0_92 = arith.constant 0 : index
      %c0_93 = arith.constant 0 : index
      %202 = vector.load %arg22[%c0_91, %c0_92, %c0_93] : memref<1x8x128xf32, #tpu.memory_space<vmem>>, vector<1x8x128xf32>
      %203 = vector.shape_cast %202 : vector<1x8x128xf32> to vector<8x128xf32>
      %204 = vector.shape_cast %201 : vector<8x128xf32> to vector<1x8x128xf32>
      tpu.vector_store %arg22[%c0_91, %c0_92, %c0_93], %204 {strides = array<i32>} : memref<1x8x128xf32, #tpu.memory_space<vmem>>, vector<1x8x128xf32>,
    } else {
    }
    return
  }
  func.func @transform_0(%arg0: i32, %arg1: i32) -> (i32, i32, i32) {
    %c0_i32 = arith.constant 0 : i32
    %c0_i32_0 = arith.constant 0 : i32
    %c0_i32_1 = arith.constant 0 : i32
    return %arg0, %c0_i32, %c0_i32_0 : i32, i32, i32
  }
  func.func @transform_1(%arg0: i32, %arg1: i32) -> (i32, i32, i32) {
    %c0_i32 = arith.constant 0 : i32
    %c0_i32_0 = arith.constant 0 : i32
    %c0_i32_1 = arith.constant 0 : i32
    return %arg0, %c0_i32, %c0_i32_0 : i32, i32, i32
  }
  func.func @transform_2(%arg0: i32, %arg1: i32) -> (i32, i32) {
    %c0_i32 = arith.constant 0 : i32
    %c0_i32_0 = arith.constant 0 : i32
    %c0_i32_1 = arith.constant 0 : i32
    return %c0_i32, %c0_i32_0 : i32, i32
  }
  func.func @transform_3(%arg0: i32, %arg1: i32) -> (i32, i32) {
    %c0_i32 = arith.constant 0 : i32
    %c0_i32_0 = arith.constant 0 : i32
    %c0_i32_1 = arith.constant 0 : i32
    return %c0_i32, %c0_i32_0 : i32, i32
  }
  func.func @transform_4(%arg0: i32, %arg1: i32) -> (i32, i32, i32) {
    %c0_i32 = arith.constant 0 : i32
    %c0_i32_0 = arith.constant 0 : i32
    %c0_i32_1 = arith.constant 0 : i32
    return %arg1, %c0_i32, %c0_i32_0 : i32, i32, i32
  }
  func.func @transform_5(%arg0: i32, %arg1: i32) -> (i32, i32, i32) {
    %c0_i32 = arith.constant 0 : i32
    %c0_i32_0 = arith.constant 0 : i32
    %c0_i32_1 = arith.constant 0 : i32
    return %arg1, %c0_i32, %c0_i32_0 : i32, i32, i32
  }
  func.func @transform_6(%arg0: i32, %arg1: i32) -> (i32, i32, i32) {
    %c0_i32 = arith.constant 0 : i32
    %c0_i32_0 = arith.constant 0 : i32
    %c0_i32_1 = arith.constant 0 : i32
    return %arg1, %c0_i32, %c0_i32_0 : i32, i32, i32
  }
  func.func @transform_7(%arg0: i32, %arg1: i32) -> (i32, i32, i32) {
    %c0_i32 = arith.constant 0 : i32
    %c0_i32_0 = arith.constant 0 : i32
    %c0_i32_1 = arith.constant 0 : i32
    return %arg1, %c0_i32, %c0_i32_0 : i32, i32, i32
  }
  func.func @transform_8(%arg0: i32, %arg1: i32) -> (i32, i32, i32) {
    %c0_i32 = arith.constant 0 : i32
    %c0_i32_0 = arith.constant 0 : i32
    %c0_i32_1 = arith.constant 0 : i32
    return %arg1, %c0_i32, %c0_i32_0 : i32, i32, i32
  }
  func.func @transform_9(%arg0: i32, %arg1: i32) -> (i32, i32, i32) {
    %c0_i32 = arith.constant 0 : i32
    %c0_i32_0 = arith.constant 0 : i32
    %c0_i32_1 = arith.constant 0 : i32
    return %arg1, %c0_i32, %c0_i32_0 : i32, i32, i32
  }
  func.func @transform_10(%arg0: i32, %arg1: i32) -> (i32, i32, i32) {
    %c0_i32 = arith.constant 0 : i32
    %c0_i32_0 = arith.constant 0 : i32
    %c0_i32_1 = arith.constant 0 : i32
    return %arg1, %c0_i32, %c0_i32_0 : i32, i32, i32
  }
  func.func @transform_11(%arg0: i32, %arg1: i32) -> (i32, i32, i32) {
    %c0_i32 = arith.constant 0 : i32
    %c0_i32_0 = arith.constant 0 : i32
    %c0_i32_1 = arith.constant 0 : i32
    return %arg1, %c0_i32, %c0_i32_0 : i32, i32, i32
  }
  func.func @transform_12(%arg0: i32, %arg1: i32) -> (i32, i32, i32) {
    %c0_i32 = arith.constant 0 : i32
    %c0_i32_0 = arith.constant 0 : i32
    %c0_i32_1 = arith.constant 0 : i32
    return %arg1, %c0_i32, %c0_i32_0 : i32, i32, i32
  }
  func.func @transform_13(%arg0: i32, %arg1: i32) -> (i32, i32, i32) {
    %c0_i32 = arith.constant 0 : i32
    %c0_i32_0 = arith.constant 0 : i32
    %c0_i32_1 = arith.constant 0 : i32
    return %arg1, %c0_i32, %c0_i32_0 : i32, i32, i32
  }
  func.func @transform_14(%arg0: i32, %arg1: i32) -> (i32, i32, i32) {
    %c0_i32 = arith.constant 0 : i32
    %c0_i32_0 = arith.constant 0 : i32
    %c0_i32_1 = arith.constant 0 : i32
    return %arg1, %c0_i32, %c0_i32_0 : i32, i32, i32
  }
  func.func @transform_15(%arg0: i32, %arg1: i32) -> (i32, i32, i32) {
    %c0_i32 = arith.constant 0 : i32
    %c0_i32_0 = arith.constant 0 : i32
    %c0_i32_1 = arith.constant 0 : i32
    return %arg1, %c0_i32, %c0_i32_0 : i32, i32, i32
  }
  func.func @transform_16(%arg0: i32, %arg1: i32) -> (i32, i32) {
    %c0_i32 = arith.constant 0 : i32
    %c0_i32_0 = arith.constant 0 : i32
    %c0_i32_1 = arith.constant 0 : i32
    return %c0_i32, %c0_i32_0 : i32, i32
  }
  func.func @transform_17(%arg0: i32, %arg1: i32) -> (i32, i32) {
    %c0_i32 = arith.constant 0 : i32
    %c0_i32_0 = arith.constant 0 : i32
    %c0_i32_1 = arith.constant 0 : i32
    return %c0_i32, %c0_i32_0 : i32, i32
  }
  func.func @transform_18(%arg0: i32, %arg1: i32) -> (i32, i32) {
    %c0_i32 = arith.constant 0 : i32
    %c0_i32_0 = arith.constant 0 : i32
    %c0_i32_1 = arith.constant 0 : i32
    return %c0_i32, %c0_i32_0 : i32, i32
  }
  func.func @transform_19(%arg0: i32, %arg1: i32) -> (i32, i32) {
    %c0_i32 = arith.constant 0 : i32
    %c0_i32_0 = arith.constant 0 : i32
    %c0_i32_1 = arith.constant 0 : i32
    return %c0_i32, %c0_i32_0 : i32, i32
  }
  func.func @transform_20(%arg0: i32, %arg1: i32) -> (i32, i32, i32) {
    %c0_i32 = arith.constant 0 : i32
    %c0_i32_0 = arith.constant 0 : i32
    %c0_i32_1 = arith.constant 0 : i32
    return %arg0, %c0_i32, %c0_i32_0 : i32, i32, i32
  }
}

</mosaic_0001>

<llo_original>
// kernel: tpu_custom_call.1
$region0: #{tpu_custom_call.1}
  #allocation0 [shape = 'u32[]', space=smem, size = 0x4, offset = 0x4, fixed_abs, tag = 'smem constant byte address 0x4 - core index']
  #allocation1 [shape = 'u32[144,128]{1,0:T(1,128)}', space=vmem, size = 0x12000, scoped, tag = 'internal scratch']
  #allocation2 [shape = 'bf16[8,64]{1,0:T(8,128)(2,1)}', space=vmem, size = 0x800, scoped, tag = 'scratch operand']
  %s0 = inlined_call_operand.hbm [shape: f32[2,8,64], index: 0, kind: input, shape index: {}]
  %s1 = inlined_call_operand.hbm [shape: f32[2,1,8], index: 1, kind: input, shape index: {}]
  %s2 = inlined_call_operand.hbm [shape: f32[1,64], index: 2, kind: input, shape index: {}]
  %s3 = inlined_call_operand.hbm [shape: f32[1,64], index: 3, kind: input, shape index: {}]
  %s4 = inlined_call_operand.vmem [shape: bf16[2,64,192], index: 4, kind: input, shape index: {}]
  %s5 = inlined_call_operand.hbm [shape: f32[2,1,192], index: 5, kind: input, shape index: {}]
  %s6 = inlined_call_operand.vmem [shape: bf16[2,64,64], index: 6, kind: input, shape index: {}]
  %s7 = inlined_call_operand.hbm [shape: f32[2,1,64], index: 7, kind: input, shape index: {}]
  %s8 = inlined_call_operand.hbm [shape: f32[2,1,64], index: 8, kind: input, shape index: {}]
  %s9 = inlined_call_operand.hbm [shape: f32[2,1,64], index: 9, kind: input, shape index: {}]
  %s10 = inlined_call_operand.hbm [shape: bf16[2,64,128], index: 10, kind: input, shape index: {}]
  %s11 = inlined_call_operand.hbm [shape: f32[2,1,128], index: 11, kind: input, shape index: {}]
  %s12 = inlined_call_operand.vmem [shape: bf16[2,128,64], index: 12, kind: input, shape index: {}]
  %s13 = inlined_call_operand.hbm [shape: f32[2,1,64], index: 13, kind: input, shape index: {}]
  %s14 = inlined_call_operand.hbm [shape: f32[2,1,64], index: 14, kind: input, shape index: {}]
  %s15 = inlined_call_operand.hbm [shape: f32[2,1,64], index: 15, kind: input, shape index: {}]
  %s16 = inlined_call_operand.hbm [shape: bf16[64,64], index: 16, kind: input, shape index: {}]
  %s17 = inlined_call_operand.hbm [shape: f32[1,64], index: 17, kind: input, shape index: {}]
  %s18 = inlined_call_operand.vmem [shape: bf16[64,128], index: 18, kind: input, shape index: {}]
  %s19 = inlined_call_operand.hbm [shape: f32[1,128], index: 19, kind: input, shape index: {}]
  %s20 = inlined_call_operand.hbm [shape: f32[2,8,128], index: 20, kind: output, shape index: {}]
  %s21 = sld [smem:[#allocation0]]
  $region185: #{tpu_custom_call.1} parent=0
    _
  %s23 = ssub.s32 1, %s21
  %s24 = scalar_select 0, %s23, %s21
  $region1: #{tpu_custom_call.1} parent=0
    #allocation3 [shape = 'u8[8192]{0}', space=vmem, size = 0x2000, scoped, tag = 'input window, operand 0']
    #allocation4 [shape = 's32[2]{0}', space=sflag, size = 0x8, scoped, tag = 'scoped memory for tpu_custom_call.1']
    #allocation5 [shape = 's32[2]{0}', space=sflag, size = 0x8, scoped, tag = 'scoped memory for tpu_custom_call.1']
    #allocation6 [shape = 'u8[1024]{0}', space=vmem, size = 0x400, scoped, tag = 'input window, operand 1']
    #allocation7 [shape = 's32[2]{0}', space=sflag, size = 0x8, scoped, tag = 'scoped memory for tpu_custom_call.1']
    #allocation8 [shape = 'u8[512]{0}', space=vmem, size = 0x400, scoped, tag = 'input window, operand 2, single buffered']
    #allocation9 [shape = 'u8[512]{0}', space=vmem, size = 0x400, scoped, tag = 'input window, operand 3, single buffered']
    #allocation10 [shape = 's32[1]{0}', space=sflag, size = 0x4, scoped, tag = 'scoped memory for tpu_custom_call.1']
    #allocation11 [shape = 'u8[2048]{0}', space=vmem, size = 0x800, scoped, tag = 'input window, operand 5']
    #allocation12 [shape = 'u8[1024]{0}', space=vmem, size = 0x400, scoped, tag = 'input window, operand 7']
    #allocation13 [shape = 'u8[1024]{0}', space=vmem, size = 0x400, scoped, tag = 'input window, operand 8']
    #allocation14 [shape = 'u8[1024]{0}', space=vmem, size = 0x400, scoped, tag = 'input window, operand 9']
    #allocation15 [shape = 'u8[32768]{0}', space=vmem, size = 0x8000, scoped, tag = 'input window, operand 10']
    #allocation16 [shape = 'u8[1024]{0}', space=vmem, size = 0x400, scoped, tag = 'input window, operand 11']
    #allocation17 [shape = 'u8[1024]{0}', space=vmem, size = 0x400, scoped, tag = 'input window, operand 13']
    #allocation18 [shape = 'u8[1024]{0}', space=vmem, size = 0x400, scoped, tag = 'input window, operand 14']
    #allocation19 [shape = 'u8[1024]{0}', space=vmem, size = 0x400, scoped, tag = 'input window, operand 15']
    #allocation20 [shape = 'u8[16384]{0}', space=vmem, size = 0x4000, scoped, tag = 'input window, operand 16, single buffered']
    #allocation21 [shape = 'u8[512]{0}', space=vmem, size = 0x400, scoped, tag = 'input window, operand 17, single buffered']
    #allocation22 [shape = 'u8[512]{0}', space=vmem, size = 0x400, scoped, tag = 'input window, operand 19, single buffered']
    #allocation23 [shape = 's32[1]{0}', space=sflag, size = 0x4, scoped, tag = 'scoped memory for tpu_custom_call.1']
    #allocation24 [shape = 'u8[8192]{0}', space=vmem, size = 0x2000, scoped, tag = 'output window, operand 0']
    %25 = vsyncpa [#allocation4], 0
    %s26 = scalar_lea.sflag [#allocation4], 1
    %27 = vsyncpa %s26, 0
    %28 = vsyncpa [#allocation7], 0
    %s29 = scalar_lea.sflag [#allocation7], 1
    %30 = vsyncpa %s29, 0
    %31 = vsyncpa [#allocation10], 0
    %32 = vsyncpa [#allocation23], 0
    %33 = vsyncpa [#allocation5], 0
    %s34 = scalar_lea.sflag [#allocation5], 1
    %35 = vsyncpa %s34, 0
    loop: start=0, step=1, limit=6
    $region2: #{tpu_custom_call.1} parent=1 // loop_pre_header
      _
    $region3: #{tpu_custom_call.1} parent=1 // loop_header
      %s37 = sphi 0, %s41
      %p38 = scmp.ge.s32.totalorder %s37, 6
      %s44 = sphi 0, %s56
      %s45 = sphi 0, %s52
      %s46 = sphi 0, %s44
      %s47 = sphi 0, %s45
      %s48 = sphi 0, %s46
      %s49 = sphi 0, %s47
      %s59 = sphi 0, %s61
      %s62 = sphi 0, %s59
      %s63 = sphi 0, %s62
      %s79 = sphi 0, %s63
      %s85 = sphi 0, %s87
      %s88 = sphi 0, %s85
      %s89 = sphi 0, %s88
      %s105 = sphi 0, %s89
      %s109 = sphi 0, %s109
      %s111 = sphi 0, %s109
      %s112 = sphi 0, %s111
      %s126 = sphi 0, %s112
      %s130 = sphi 0, %s130
      %s132 = sphi 0, %s130
      %s133 = sphi 0, %s132
      %s147 = sphi 0, %s133
      %s153 = sphi 0, %s155
      %s156 = sphi 0, %s153
      %s157 = sphi 0, %s156
      %s173 = sphi 0, %s157
      %s179 = sphi 0, %s181
      %s182 = sphi 0, %s179
      %s183 = sphi 0, %s182
      %s199 = sphi 0, %s183
      %s205 = sphi 0, %s207
      %s208 = sphi 0, %s205
      %s209 = sphi 0, %s208
      %s225 = sphi 0, %s209
      %s231 = sphi 0, %s233
      %s234 = sphi 0, %s231
      %s235 = sphi 0, %s234
      %s251 = sphi 0, %s235
      %s257 = sphi 0, %s259
      %s260 = sphi 0, %s257
      %s261 = sphi 0, %s260
      %s277 = sphi 0, %s261
      %s283 = sphi 0, %s285
      %s286 = sphi 0, %s283
      %s287 = sphi 0, %s286
      %s303 = sphi 0, %s287
      %s309 = sphi 0, %s311
      %s312 = sphi 0, %s309
      %s313 = sphi 0, %s312
      %s329 = sphi 0, %s313
      %s335 = sphi 0, %s337
      %s338 = sphi 0, %s335
      %s339 = sphi 0, %s338
      %s355 = sphi 0, %s339
      %s361 = sphi 0, %s363
      %s364 = sphi 0, %s361
      %s365 = sphi 0, %s364
      %s381 = sphi 0, %s365
      %s387 = sphi 0, %s389
      %s390 = sphi 0, %s387
      %s391 = sphi 0, %s390
      %s407 = sphi 0, %s391
      %s413 = sphi 0, %s415
      %s416 = sphi 0, %s413
      %s417 = sphi 0, %s416
      %s433 = sphi 0, %s417
      %s439 = sphi 0, %s441
      %s442 = sphi 0, %s439
      %s443 = sphi 0, %s442
      %s459 = sphi 0, %s443
      %s463 = sphi 0, %s463
      %s465 = sphi 0, %s463
      %s466 = sphi 0, %s465
      %s480 = sphi 0, %s466
      %s484 = sphi 0, %s484
      %s486 = sphi 0, %s484
      %s487 = sphi 0, %s486
      %s501 = sphi 0, %s487
      %s505 = sphi 0, %s505
      %s507 = sphi 0, %s505
      %s508 = sphi 0, %s507
      %s522 = sphi 0, %s508
      %s526 = sphi 0, %s526
      %s528 = sphi 0, %s526
      %s529 = sphi 0, %s528
      %s543 = sphi 0, %s529
      %s549 = sphi 0, %s551
      %s552 = sphi 0, %s549
      %s553 = sphi 0, %s552
      %s569 = sphi 0, %s553
    $region4: #{tpu_custom_call.1} parent=1 // loop_header_branch
      %40 = sbr.rel (%p38) target = $region8
    $region5: #{tpu_custom_call.1} parent=1 // loop_body
      %s42 = ssub.s32 %s37, 1
      %s43 = ssub.s32 %s37, 2
      %s50 = sadd.s32 1, %s45
      %p51 = scmp.ge.s32.totalorder %s50, 2
      %s52 = scalar_select %p51, 0, %s50
      %s53 = sadd.s32 1, %s44
      %s54 = scalar_select %p51, %s53, %s44
      %p55 = scmp.ge.s32.totalorder %s54, 2
      %s56 = scalar_select %p55, 0, %s54
      %s57 = ssub.s32 %s44, %s56
      %p58 = scmp.eq.s32.totalorder %s57, 0
      %s60 = sadd.s32 %s59, 1
      %s61 = scalar_select %p58, %s59, %s60
      %p64 = pneg %p58
      %p65 = scmp.eq.s32.totalorder %s37, 3
      %p66 = por %p64, %p65
      %p67 = scmp.ne.s32.totalorder %s59, %s62
      %p68 = scmp.eq.s32.totalorder %s37, 0
      %p69 = por %p67, %p68
      %p70 = scmp.ne.s32.totalorder %s59, %s62
      %p71 = scmp.eq.s32.totalorder %s42, 3
      %p72 = por %p70, %p71
      %p73 = scmp.ne.s32.totalorder %s62, %s63
      %p74 = scmp.eq.s32.totalorder %s42, 0
      %p75 = por %p73, %p74
      %p76 = scmp.ne.s32.totalorder %s62, %s63
      %p77 = scmp.eq.s32.totalorder %s43, 3
      %p78 = por %p76, %p77
      %p80 = scmp.ne.s32.totalorder %s63, %s79
      %p81 = scmp.eq.s32.totalorder %s43, 0
      %p82 = por %p80, %p81
      %s83 = ssub.s32 %s44, %s56
      %p84 = scmp.eq.s32.totalorder %s83, 0
      %s86 = sadd.s32 %s85, 1
      %s87 = scalar_select %p84, %s85, %s86
      %p90 = pneg %p84
      %p91 = scmp.eq.s32.totalorder %s37, 3
      %p92 = por %p90, %p91
      %p93 = scmp.ne.s32.totalorder %s85, %s88
      %p94 = scmp.eq.s32.totalorder %s37, 0
      %p95 = por %p93, %p94
      %p96 = scmp.ne.s32.totalorder %s85, %s88
      %p97 = scmp.eq.s32.totalorder %s42, 3
      %p98 = por %p96, %p97
      %p99 = scmp.ne.s32.totalorder %s88, %s89
      %p100 = scmp.eq.s32.totalorder %s42, 0
      %p101 = por %p99, %p100
      %p102 = scmp.ne.s32.totalorder %s88, %s89
      %p103 = scmp.eq.s32.totalorder %s43, 3
      %p104 = por %p102, %p103
      %p106 = scmp.ne.s32.totalorder %s89, %s105
      %p107 = scmp.eq.s32.totalorder %s43, 0
      %p108 = por %p106, %p107
      %s110 = sadd.s32 %s109, 1
      %p113 = scmp.eq.s32.totalorder %s37, 3
      %p114 = scmp.ne.s32.totalorder %s109, %s111
      %p115 = scmp.eq.s32.totalorder %s37, 0
      %p116 = por %p114, %p115
      %p117 = scmp.ne.s32.totalorder %s109, %s111
      %p118 = scmp.eq.s32.totalorder %s42, 3
      %p119 = por %p117, %p118
      %p120 = scmp.ne.s32.totalorder %s111, %s112
      %p121 = scmp.eq.s32.totalorder %s42, 0
      %p122 = por %p120, %p121
      %p123 = scmp.ne.s32.totalorder %s111, %s112
      %p124 = scmp.eq.s32.totalorder %s43, 3
      %p125 = por %p123, %p124
      %p127 = scmp.ne.s32.totalorder %s112, %s126
      %p128 = scmp.eq.s32.totalorder %s43, 0
      %p129 = por %p127, %p128
      %s131 = sadd.s32 %s130, 1
      %p134 = scmp.eq.s32.totalorder %s37, 3
      %p135 = scmp.ne.s32.totalorder %s130, %s132
      %p136 = scmp.eq.s32.totalorder %s37, 0
      %p137 = por %p135, %p136
      %p138 = scmp.ne.s32.totalorder %s130, %s132
      %p139 = scmp.eq.s32.totalorder %s42, 3
      %p140 = por %p138, %p139
      %p141 = scmp.ne.s32.totalorder %s132, %s133
      %p142 = scmp.eq.s32.totalorder %s42, 0
      %p143 = por %p141, %p142
      %p144 = scmp.ne.s32.totalorder %s132, %s133
      %p145 = scmp.eq.s32.totalorder %s43, 3
      %p146 = por %p144, %p145
      %p148 = scmp.ne.s32.totalorder %s133, %s147
      %p149 = scmp.eq.s32.totalorder %s43, 0
      %p150 = por %p148, %p149
      %s151 = ssub.s32 %s45, %s52
      %p152 = scmp.eq.s32.totalorder %s151, 0
      %s154 = sadd.s32 %s153, 1
      %s155 = scalar_select %p152, %s153, %s154
      %p158 = pneg %p152
      %p159 = scmp.eq.s32.totalorder %s37, 3
      %p160 = por %p158, %p159
      %p161 = scmp.ne.s32.totalorder %s153, %s156
      %p162 = scmp.eq.s32.totalorder %s37, 0
      %p163 = por %p161, %p162
      %p164 = scmp.ne.s32.totalorder %s153, %s156
      %p165 = scmp.eq.s32.totalorder %s42, 3
      %p166 = por %p164, %p165
      %p167 = scmp.ne.s32.totalorder %s156, %s157
      %p168 = scmp.eq.s32.totalorder %s42, 0
      %p169 = por %p167, %p168
      %p170 = scmp.ne.s32.totalorder %s156, %s157
      %p171 = scmp.eq.s32.totalorder %s43, 3
      %p172 = por %p170, %p171
      %p174 = scmp.ne.s32.totalorder %s157, %s173
      %p175 = scmp.eq.s32.totalorder %s43, 0
      %p176 = por %p174, %p175
      %s177 = ssub.s32 %s45, %s52
      %p178 = scmp.eq.s32.totalorder %s177, 0
      %s180 = sadd.s32 %s179, 1
      %s181 = scalar_select %p178, %s179, %s180
      %p184 = pneg %p178
      %p185 = scmp.eq.s32.totalorder %s37, 3
      %p186 = por %p184, %p185
      %p187 = scmp.ne.s32.totalorder %s179, %s182
      %p188 = scmp.eq.s32.totalorder %s37, 0
      %p189 = por %p187, %p188
      %p190 = scmp.ne.s32.totalorder %s179, %s182
      %p191 = scmp.eq.s32.totalorder %s42, 3
      %p192 = por %p190, %p191
      %p193 = scmp.ne.s32.totalorder %s182, %s183
      %p194 = scmp.eq.s32.totalorder %s42, 0
      %p195 = por %p193, %p194
      %p196 = scmp.ne.s32.totalorder %s182, %s183
      %p197 = scmp.eq.s32.totalorder %s43, 3
      %p198 = por %p196, %p197
      %p200 = scmp.ne.s32.totalorder %s183, %s199
      %p201 = scmp.eq.s32.totalorder %s43, 0
      %p202 = por %p200, %p201
      %s203 = ssub.s32 %s45, %s52
      %p204 = scmp.eq.s32.totalorder %s203, 0
      %s206 = sadd.s32 %s205, 1
      %s207 = scalar_select %p204, %s205, %s206
      %p210 = pneg %p204
      %p211 = scmp.eq.s32.totalorder %s37, 3
      %p212 = por %p210, %p211
      %p213 = scmp.ne.s32.totalorder %s205, %s208
      %p214 = scmp.eq.s32.totalorder %s37, 0
      %p215 = por %p213, %p214
      %p216 = scmp.ne.s32.totalorder %s205, %s208
      %p217 = scmp.eq.s32.totalorder %s42, 3
      %p218 = por %p216, %p217
      %p219 = scmp.ne.s32.totalorder %s208, %s209
      %p220 = scmp.eq.s32.totalorder %s42, 0
      %p221 = por %p219, %p220
      %p222 = scmp.ne.s32.totalorder %s208, %s209
      %p223 = scmp.eq.s32.totalorder %s43, 3
      %p224 = por %p222, %p223
      %p226 = scmp.ne.s32.totalorder %s209, %s225
      %p227 = scmp.eq.s32.totalorder %s43, 0
      %p228 = por %p226, %p227
      %s229 = ssub.s32 %s45, %s52
      %p230 = scmp.eq.s32.totalorder %s229, 0
      %s232 = sadd.s32 %s231, 1
      %s233 = scalar_select %p230, %s231, %s232
      %p236 = pneg %p230
      %p237 = scmp.eq.s32.totalorder %s37, 3
      %p238 = por %p236, %p237
      %p239 = scmp.ne.s32.totalorder %s231, %s234
      %p240 = scmp.eq.s32.totalorder %s37, 0
      %p241 = por %p239, %p240
      %p242 = scmp.ne.s32.totalorder %s231, %s234
      %p243 = scmp.eq.s32.totalorder %s42, 3
      %p244 = por %p242, %p243
      %p245 = scmp.ne.s32.totalorder %s234, %s235
      %p246 = scmp.eq.s32.totalorder %s42, 0
      %p247 = por %p245, %p246
      %p248 = scmp.ne.s32.totalorder %s234, %s235
      %p249 = scmp.eq.s32.totalorder %s43, 3
      %p250 = por %p248, %p249
      %p252 = scmp.ne.s32.totalorder %s235, %s251
      %p253 = scmp.eq.s32.totalorder %s43, 0
      %p254 = por %p252, %p253
      %s255 = ssub.s32 %s45, %s52
      %p256 = scmp.eq.s32.totalorder %s255, 0
      %s258 = sadd.s32 %s257, 1
      %s259 = scalar_select %p256, %s257, %s258
      %p262 = pneg %p256
      %p263 = scmp.eq.s32.totalorder %s37, 3
      %p264 = por %p262, %p263
      %p265 = scmp.ne.s32.totalorder %s257, %s260
      %p266 = scmp.eq.s32.totalorder %s37, 0
      %p267 = por %p265, %p266
      %p268 = scmp.ne.s32.totalorder %s257, %s260
      %p269 = scmp.eq.s32.totalorder %s42, 3
      %p270 = por %p268, %p269
      %p271 = scmp.ne.s32.totalorder %s260, %s261
      %p272 = scmp.eq.s32.totalorder %s42, 0
      %p273 = por %p271, %p272
      %p274 = scmp.ne.s32.totalorder %s260, %s261
      %p275 = scmp.eq.s32.totalorder %s43, 3
      %p276 = por %p274, %p275
      %p278 = scmp.ne.s32.totalorder %s261, %s277
      %p279 = scmp.eq.s32.totalorder %s43, 0
      %p280 = por %p278, %p279
      %s281 = ssub.s32 %s45, %s52
      %p282 = scmp.eq.s32.totalorder %s281, 0
      %s284 = sadd.s32 %s283, 1
      %s285 = scalar_select %p282, %s283, %s284
      %p288 = pneg %p282
      %p289 = scmp.eq.s32.totalorder %s37, 3
      %p290 = por %p288, %p289
      %p291 = scmp.ne.s32.totalorder %s283, %s286
      %p292 = scmp.eq.s32.totalorder %s37, 0
      %p293 = por %p291, %p292
      %p294 = scmp.ne.s32.totalorder %s283, %s286
      %p295 = scmp.eq.s32.totalorder %s42, 3
      %p296 = por %p294, %p295
      %p297 = scmp.ne.s32.totalorder %s286, %s287
      %p298 = scmp.eq.s32.totalorder %s42, 0
      %p299 = por %p297, %p298
      %p300 = scmp.ne.s32.totalorder %s286, %s287
      %p301 = scmp.eq.s32.totalorder %s43, 3
      %p302 = por %p300, %p301
      %p304 = scmp.ne.s32.totalorder %s287, %s303
      %p305 = scmp.eq.s32.totalorder %s43, 0
      %p306 = por %p304, %p305
      %s307 = ssub.s32 %s45, %s52
      %p308 = scmp.eq.s32.totalorder %s307, 0
      %s310 = sadd.s32 %s309, 1
      %s311 = scalar_select %p308, %s309, %s310
      %p314 = pneg %p308
      %p315 = scmp.eq.s32.totalorder %s37, 3
      %p316 = por %p314, %p315
      %p317 = scmp.ne.s32.totalorder %s309, %s312
      %p318 = scmp.eq.s32.totalorder %s37, 0
      %p319 = por %p317, %p318
      %p320 = scmp.ne.s32.totalorder %s309, %s312
      %p321 = scmp.eq.s32.totalorder %s42, 3
      %p322 = por %p320, %p321
      %p323 = scmp.ne.s32.totalorder %s312, %s313
      %p324 = scmp.eq.s32.totalorder %s42, 0
      %p325 = por %p323, %p324
      %p326 = scmp.ne.s32.totalorder %s312, %s313
      %p327 = scmp.eq.s32.totalorder %s43, 3
      %p328 = por %p326, %p327
      %p330 = scmp.ne.s32.totalorder %s313, %s329
      %p331 = scmp.eq.s32.totalorder %s43, 0
      %p332 = por %p330, %p331
      %s333 = ssub.s32 %s45, %s52
      %p334 = scmp.eq.s32.totalorder %s333, 0
      %s336 = sadd.s32 %s335, 1
      %s337 = scalar_select %p334, %s335, %s336
      %p340 = pneg %p334
      %p341 = scmp.eq.s32.totalorder %s37, 3
      %p342 = por %p340, %p341
      %p343 = scmp.ne.s32.totalorder %s335, %s338
      %p344 = scmp.eq.s32.totalorder %s37, 0
      %p345 = por %p343, %p344
      %p346 = scmp.ne.s32.totalorder %s335, %s338
      %p347 = scmp.eq.s32.totalorder %s42, 3
      %p348 = por %p346, %p347
      %p349 = scmp.ne.s32.totalorder %s338, %s339
      %p350 = scmp.eq.s32.totalorder %s42, 0
      %p351 = por %p349, %p350
      %p352 = scmp.ne.s32.totalorder %s338, %s339
      %p353 = scmp.eq.s32.totalorder %s43, 3
      %p354 = por %p352, %p353
      %p356 = scmp.ne.s32.totalorder %s339, %s355
      %p357 = scmp.eq.s32.totalorder %s43, 0
      %p358 = por %p356, %p357
      %s359 = ssub.s32 %s45, %s52
      %p360 = scmp.eq.s32.totalorder %s359, 0
      %s362 = sadd.s32 %s361, 1
      %s363 = scalar_select %p360, %s361, %s362
      %p366 = pneg %p360
      %p367 = scmp.eq.s32.totalorder %s37, 3
      %p368 = por %p366, %p367
      %p369 = scmp.ne.s32.totalorder %s361, %s364
      %p370 = scmp.eq.s32.totalorder %s37, 0
      %p371 = por %p369, %p370
      %p372 = scmp.ne.s32.totalorder %s361, %s364
      %p373 = scmp.eq.s32.totalorder %s42, 3
      %p374 = por %p372, %p373
      %p375 = scmp.ne.s32.totalorder %s364, %s365
      %p376 = scmp.eq.s32.totalorder %s42, 0
      %p377 = por %p375, %p376
      %p378 = scmp.ne.s32.totalorder %s364, %s365
      %p379 = scmp.eq.s32.totalorder %s43, 3
      %p380 = por %p378, %p379
      %p382 = scmp.ne.s32.totalorder %s365, %s381
      %p383 = scmp.eq.s32.totalorder %s43, 0
      %p384 = por %p382, %p383
      %s385 = ssub.s32 %s45, %s52
      %p386 = scmp.eq.s32.totalorder %s385, 0
      %s388 = sadd.s32 %s387, 1
      %s389 = scalar_select %p386, %s387, %s388
      %p392 = pneg %p386
      %p393 = scmp.eq.s32.totalorder %s37, 3
      %p394 = por %p392, %p393
      %p395 = scmp.ne.s32.totalorder %s387, %s390
      %p396 = scmp.eq.s32.totalorder %s37, 0
      %p397 = por %p395, %p396
      %p398 = scmp.ne.s32.totalorder %s387, %s390
      %p399 = scmp.eq.s32.totalorder %s42, 3
      %p400 = por %p398, %p399
      %p401 = scmp.ne.s32.totalorder %s390, %s391
      %p402 = scmp.eq.s32.totalorder %s42, 0
      %p403 = por %p401, %p402
      %p404 = scmp.ne.s32.totalorder %s390, %s391
      %p405 = scmp.eq.s32.totalorder %s43, 3
      %p406 = por %p404, %p405
      %p408 = scmp.ne.s32.totalorder %s391, %s407
      %p409 = scmp.eq.s32.totalorder %s43, 0
      %p410 = por %p408, %p409
      %s411 = ssub.s32 %s45, %s52
      %p412 = scmp.eq.s32.totalorder %s411, 0
      %s414 = sadd.s32 %s413, 1
      %s415 = scalar_select %p412, %s413, %s414
      %p418 = pneg %p412
      %p419 = scmp.eq.s32.totalorder %s37, 3
      %p420 = por %p418, %p419
      %p421 = scmp.ne.s32.totalorder %s413, %s416
      %p422 = scmp.eq.s32.totalorder %s37, 0
      %p423 = por %p421, %p422
      %p424 = scmp.ne.s32.totalorder %s413, %s416
      %p425 = scmp.eq.s32.totalorder %s42, 3
      %p426 = por %p424, %p425
      %p427 = scmp.ne.s32.totalorder %s416, %s417
      %p428 = scmp.eq.s32.totalorder %s42, 0
      %p429 = por %p427, %p428
      %p430 = scmp.ne.s32.totalorder %s416, %s417
      %p431 = scmp.eq.s32.totalorder %s43, 3
      %p432 = por %p430, %p431
      %p434 = scmp.ne.s32.totalorder %s417, %s433
      %p435 = scmp.eq.s32.totalorder %s43, 0
      %p436 = por %p434, %p435
      %s437 = ssub.s32 %s45, %s52
      %p438 = scmp.eq.s32.totalorder %s437, 0
      %s440 = sadd.s32 %s439, 1
      %s441 = scalar_select %p438, %s439, %s440
      %p444 = pneg %p438
      %p445 = scmp.eq.s32.totalorder %s37, 3
      %p446 = por %p444, %p445
      %p447 = scmp.ne.s32.totalorder %s439, %s442
      %p448 = scmp.eq.s32.totalorder %s37, 0
      %p449 = por %p447, %p448
      %p450 = scmp.ne.s32.totalorder %s439, %s442
      %p451 = scmp.eq.s32.totalorder %s42, 3
      %p452 = por %p450, %p451
      %p453 = scmp.ne.s32.totalorder %s442, %s443
      %p454 = scmp.eq.s32.totalorder %s42, 0
      %p455 = por %p453, %p454
      %p456 = scmp.ne.s32.totalorder %s442, %s443
      %p457 = scmp.eq.s32.totalorder %s43, 3
      %p458 = por %p456, %p457
      %p460 = scmp.ne.s32.totalorder %s443, %s459
      %p461 = scmp.eq.s32.totalorder %s43, 0
      %p462 = por %p460, %p461
      %s464 = sadd.s32 %s463, 1
      %p467 = scmp.eq.s32.totalorder %s37, 3
      %p468 = scmp.ne.s32.totalorder %s463, %s465
      %p469 = scmp.eq.s32.totalorder %s37, 0
      %p470 = por %p468, %p469
      %p471 = scmp.ne.s32.totalorder %s463, %s465
      %p472 = scmp.eq.s32.totalorder %s42, 3
      %p473 = por %p471, %p472
      %p474 = scmp.ne.s32.totalorder %s465, %s466
      %p475 = scmp.eq.s32.totalorder %s42, 0
      %p476 = por %p474, %p475
      %p477 = scmp.ne.s32.totalorder %s465, %s466
      %p478 = scmp.eq.s32.totalorder %s43, 3
      %p479 = por %p477, %p478
      %p481 = scmp.ne.s32.totalorder %s466, %s480
      %p482 = scmp.eq.s32.totalorder %s43, 0
      %p483 = por %p481, %p482
      %s485 = sadd.s32 %s484, 1
      %p488 = scmp.eq.s32.totalorder %s37, 3
      %p489 = scmp.ne.s32.totalorder %s484, %s486
      %p490 = scmp.eq.s32.totalorder %s37, 0
      %p491 = por %p489, %p490
      %p492 = scmp.ne.s32.totalorder %s484, %s486
      %p493 = scmp.eq.s32.totalorder %s42, 3
      %p494 = por %p492, %p493
      %p495 = scmp.ne.s32.totalorder %s486, %s487
      %p496 = scmp.eq.s32.totalorder %s42, 0
      %p497 = por %p495, %p496
      %p498 = scmp.ne.s32.totalorder %s486, %s487
      %p499 = scmp.eq.s32.totalorder %s43, 3
      %p500 = por %p498, %p499
      %p502 = scmp.ne.s32.totalorder %s487, %s501
      %p503 = scmp.eq.s32.totalorder %s43, 0
      %p504 = por %p502, %p503
      %s506 = sadd.s32 %s505, 1
      %p509 = scmp.eq.s32.totalorder %s37, 3
      %p510 = scmp.ne.s32.totalorder %s505, %s507
      %p511 = scmp.eq.s32.totalorder %s37, 0
      %p512 = por %p510, %p511
      %p513 = scmp.ne.s32.totalorder %s505, %s507
      %p514 = scmp.eq.s32.totalorder %s42, 3
      %p515 = por %p513, %p514
      %p516 = scmp.ne.s32.totalorder %s507, %s508
      %p517 = scmp.eq.s32.totalorder %s42, 0
      %p518 = por %p516, %p517
      %p519 = scmp.ne.s32.totalorder %s507, %s508
      %p520 = scmp.eq.s32.totalorder %s43, 3
      %p521 = por %p519, %p520
      %p523 = scmp.ne.s32.totalorder %s508, %s522
      %p524 = scmp.eq.s32.totalorder %s43, 0
      %p525 = por %p523, %p524
      %s527 = sadd.s32 %s526, 1
      %p530 = scmp.eq.s32.totalorder %s37, 3
      %p531 = scmp.ne.s32.totalorder %s526, %s528
      %p532 = scmp.eq.s32.totalorder %s37, 0
      %p533 = por %p531, %p532
      %p534 = scmp.ne.s32.totalorder %s526, %s528
      %p535 = scmp.eq.s32.totalorder %s42, 3
      %p536 = por %p534, %p535
      %p537 = scmp.ne.s32.totalorder %s528, %s529
      %p538 = scmp.eq.s32.totalorder %s42, 0
      %p539 = por %p537, %p538
      %p540 = scmp.ne.s32.totalorder %s528, %s529
      %p541 = scmp.eq.s32.totalorder %s43, 3
      %p542 = por %p540, %p541
      %p544 = scmp.ne.s32.totalorder %s529, %s543
      %p545 = scmp.eq.s32.totalorder %s43, 0
      %p546 = por %p544, %p545
      %s547 = ssub.s32 %s44, %s56
      %p548 = scmp.eq.s32.totalorder %s547, 0
      %s550 = sadd.s32 %s549, 1
      %s551 = scalar_select %p548, %s549, %s550
      %p554 = pneg %p548
      %p555 = scmp.eq.s32.totalorder %s37, 3
      %p556 = por %p554, %p555
      %p557 = scmp.ne.s32.totalorder %s549, %s552
      %p558 = scmp.eq.s32.totalorder %s37, 0
      %p559 = por %p557, %p558
      %p560 = scmp.ne.s32.totalorder %s549, %s552
      %p561 = scmp.eq.s32.totalorder %s42, 3
      %p562 = por %p560, %p561
      %p563 = scmp.ne.s32.totalorder %s552, %s553
      %p564 = scmp.eq.s32.totalorder %s42, 0
      %p565 = por %p563, %p564
      %p566 = scmp.ne.s32.totalorder %s552, %s553
      %p567 = scmp.eq.s32.totalorder %s43, 3
      %p568 = por %p566, %p567
      %p570 = scmp.ne.s32.totalorder %s553, %s569
      %p571 = scmp.eq.s32.totalorder %s43, 0
      %p572 = por %p570, %p571
      %p573 = scmp.le.s32.totalorder 1, %s37
      %p574 = scmp.lt.s32.totalorder %s37, 5
      %p575 = pnand %p573, %p574
      %p576 = pneg %p575
      // Predicated region
      $region9: #{tpu_custom_call.1} parent=5 // pred_check
        _
      $region10: #{tpu_custom_call.1} parent=5 // pred_check_branch
        %578 = sbr.rel (%p575) target = $region12
      $region11: #{tpu_custom_call.1} parent=5 // pred_region
        %s579 = ssub.s32 %s37, 1
        // Predicated region
        $region13: #{tpu_custom_call.1} parent=11 // pred_check
          %p580 = pneg %p122
        $region14: #{tpu_custom_call.1} parent=11 // pred_check_branch
          %582 = sbr.rel (%p580) target = $region16
        $region15: #{tpu_custom_call.1} parent=11 // pred_region
          %s584 = ssub.s32 16, 16
          %585 = vsyncadd [#allocation7], %s584
          %s587 = sshll.u32 [#allocation8], 4
          %s588 = int_to_ptr.vmem [resolvable:$true] %s587
          %590 = dma.hbm_to_vmem [thread:$0]  %s2, 16, %s588, [#allocation7]
        $region16: #{tpu_custom_call.1} parent=11 // pred_fallthru
          _
        // Predicated region
        $region17: #{tpu_custom_call.1} parent=11 // pred_check
          %p591 = pneg %p143
        $region18: #{tpu_custom_call.1} parent=11 // pred_check_branch
          %593 = sbr.rel (%p591) target = $region20
        $region19: #{tpu_custom_call.1} parent=11 // pred_region
          %s595 = ssub.s32 16, 16
          %596 = vsyncadd [#allocation10], %s595
          %s598 = sshll.u32 [#allocation9], 4
          %s599 = int_to_ptr.vmem [resolvable:$true] %s598
          %601 = dma.hbm_to_vmem [thread:$0]  %s3, 16, %s599, [#allocation10]
        $region20: #{tpu_custom_call.1} parent=11 // pred_fallthru
          _
        // Predicated region
        $region21: #{tpu_custom_call.1} parent=11 // pred_check
          %p602 = pneg %p476
        $region22: #{tpu_custom_call.1} parent=11 // pred_check_branch
          %604 = sbr.rel (%p602) target = $region24
        $region23: #{tpu_custom_call.1} parent=11 // pred_region
          %s606 = ssub.s32 512, 512
          %607 = vsyncadd [#allocation7], %s606
          %s608 = sshll.u32 [#allocation20], 4
          %s609 = int_to_ptr.vmem [resolvable:$true] %s608
          %614 = dma.hbm_to_vmem [thread:$0]  %s16, 512, %s609, [#allocation7], 64, 64, 4
        $region24: #{tpu_custom_call.1} parent=11 // pred_fallthru
          _
        // Predicated region
        $region25: #{tpu_custom_call.1} parent=11 // pred_check
          %p615 = pneg %p497
        $region26: #{tpu_custom_call.1} parent=11 // pred_check_branch
          %617 = sbr.rel (%p615) target = $region28
        $region27: #{tpu_custom_call.1} parent=11 // pred_region
          %s619 = ssub.s32 16, 16
          %620 = vsyncadd [#allocation10], %s619
          %s622 = sshll.u32 [#allocation21], 4
          %s623 = int_to_ptr.vmem [resolvable:$true] %s622
          %625 = dma.hbm_to_vmem [thread:$0]  %s17, 16, %s623, [#allocation10]
        $region28: #{tpu_custom_call.1} parent=11 // pred_fallthru
          _
        // Predicated region
        $region29: #{tpu_custom_call.1} parent=11 // pred_check
          %p626 = pneg %p518
        $region30: #{tpu_custom_call.1} parent=11 // pred_check_branch
          %628 = sbr.rel (%p626) target = $region32
        $region31: #{tpu_custom_call.1} parent=11 // pred_region
          _
        $region32: #{tpu_custom_call.1} parent=11 // pred_fallthru
          _
        // Predicated region
        $region33: #{tpu_custom_call.1} parent=11 // pred_check
          %p629 = pneg %p539
        $region34: #{tpu_custom_call.1} parent=11 // pred_check_branch
          %631 = sbr.rel (%p629) target = $region36
        $region35: #{tpu_custom_call.1} parent=11 // pred_region
          %s633 = ssub.s32 16, 16
          %634 = vsyncadd [#allocation23], %s633
          %s636 = sshll.u32 [#allocation22], 4
          %s637 = int_to_ptr.vmem [resolvable:$true] %s636
          %639 = dma.hbm_to_vmem [thread:$0]  %s19, 16, %s637, [#allocation23]
        $region36: #{tpu_custom_call.1} parent=11 // pred_fallthru
          _
      $region12: #{tpu_custom_call.1} parent=5 // pred_fallthru
        _
      %p640 = scmp.lt.s32.totalorder %s37, 4
      // Predicated region
      $region37: #{tpu_custom_call.1} parent=5 // pred_check
        %p641 = pneg %p640
      $region38: #{tpu_custom_call.1} parent=5 // pred_check_branch
        %643 = sbr.rel (%p641) target = $region40
      $region39: #{tpu_custom_call.1} parent=5 // pred_region
        // Predicated region
        $region41: #{tpu_custom_call.1} parent=39 // pred_check
          %p644 = pneg %p69
        $region42: #{tpu_custom_call.1} parent=39 // pred_check_branch
          %646 = sbr.rel (%p644) target = $region44
        $region43: #{tpu_custom_call.1} parent=39 // pred_region
          %s647 = sand.u32 %s37, 1
          %s648 = scalar_lea.sflag [#allocation4], %s647
          %s649 = sand.u32 %s59, 1
          %s650 = smul.addr %s649, 8
          %s651 = scalar_lea.vmem [#allocation3], %s650
          %s653 = ssub.s32 128, 128
          %654 = vsyncadd %s648, %s653
          %s655 = smul.addr %s44, 128
          %s656 = scalar_lea.hbm %s0, %s655
          %s658 = sshll.u32 %s651, 4
          %s659 = int_to_ptr.vmem [resolvable:$true] %s658
          %661 = dma.hbm_to_vmem [thread:$0]  %s656, 128, %s659, %s648
        $region44: #{tpu_custom_call.1} parent=39 // pred_fallthru
          _
        // Predicated region
        $region45: #{tpu_custom_call.1} parent=39 // pred_check
          %p662 = pneg %p95
        $region46: #{tpu_custom_call.1} parent=39 // pred_check_branch
          %664 = sbr.rel (%p662) target = $region48
        $region47: #{tpu_custom_call.1} parent=39 // pred_region
          %s665 = sand.u32 %s37, 1
          %s666 = scalar_lea.sflag [#allocation7], %s665
          %s667 = sand.u32 %s85, 1
          %s668 = scalar_lea.vmem [#allocation6], %s667
          %s670 = ssub.s32 16, 16
          %671 = vsyncadd %s666, %s670
          %s672 = smul.addr %s44, 16
          %s673 = scalar_lea.hbm %s1, %s672
          %s675 = sshll.u32 %s668, 4
          %s676 = int_to_ptr.vmem [resolvable:$true] %s675
          %678 = dma.hbm_to_vmem [thread:$0]  %s673, 16, %s676, %s666
        $region48: #{tpu_custom_call.1} parent=39 // pred_fallthru
          _
        // Predicated region
        $region49: #{tpu_custom_call.1} parent=39 // pred_check
          %p679 = pneg %p163
        $region50: #{tpu_custom_call.1} parent=39 // pred_check_branch
          %681 = sbr.rel (%p679) target = $region52
        $region51: #{tpu_custom_call.1} parent=39 // pred_region
          %p682 = scmp.lt.s32.totalorder %s45, 1
          %s683 = scalar_select %p682, %s45, 1
          %s684 = smul.addr %s683, 16
          %s685 = smul.addr %s684, 4
          %s686 = scalar_lea.vmem %s4, %s685
        $region52: #{tpu_custom_call.1} parent=39 // pred_fallthru
          _
        // Predicated region
        $region53: #{tpu_custom_call.1} parent=39 // pred_check
          %p687 = pneg %p189
        $region54: #{tpu_custom_call.1} parent=39 // pred_check_branch
          %689 = sbr.rel (%p687) target = $region56
        $region55: #{tpu_custom_call.1} parent=39 // pred_region
          %s690 = sand.u32 %s37, 1
          %s691 = scalar_lea.sflag [#allocation4], %s690
          %s692 = sand.u32 %s179, 1
          %s693 = smul.addr %s692, 2
          %s694 = scalar_lea.vmem [#allocation11], %s693
          %s696 = ssub.s32 32, 32
          %697 = vsyncadd %s691, %s696
          %s698 = smul.addr %s45, 2
          %s699 = smul.addr %s698, 16
          %s700 = scalar_lea.hbm %s5, %s699
          %s702 = sshll.u32 %s694, 4
          %s703 = int_to_ptr.vmem [resolvable:$true] %s702
          %705 = dma.hbm_to_vmem [thread:$0]  %s700, 32, %s703, %s691
        $region56: #{tpu_custom_call.1} parent=39 // pred_fallthru
          _
        // Predicated region
        $region57: #{tpu_custom_call.1} parent=39 // pred_check
          %p706 = pneg %p215
        $region58: #{tpu_custom_call.1} parent=39 // pred_check_branch
          %708 = sbr.rel (%p706) target = $region60
        $region59: #{tpu_custom_call.1} parent=39 // pred_region
          %p709 = scmp.lt.s32.totalorder %s45, 1
          %s710 = scalar_select %p709, %s45, 1
          %s711 = smul.addr %s710, 8
          %s712 = smul.addr %s711, 4
          %s713 = scalar_lea.vmem %s6, %s712
        $region60: #{tpu_custom_call.1} parent=39 // pred_fallthru
          _
        // Predicated region
        $region61: #{tpu_custom_call.1} parent=39 // pred_check
          %p714 = pneg %p241
        $region62: #{tpu_custom_call.1} parent=39 // pred_check_branch
          %716 = sbr.rel (%p714) target = $region64
        $region63: #{tpu_custom_call.1} parent=39 // pred_region
          %s717 = sand.u32 %s37, 1
          %s718 = scalar_lea.sflag [#allocation7], %s717
          %s719 = sand.u32 %s231, 1
          %s720 = scalar_lea.vmem [#allocation12], %s719
          %s722 = ssub.s32 16, 16
          %723 = vsyncadd %s718, %s722
          %s724 = smul.addr %s45, 16
          %s725 = scalar_lea.hbm %s7, %s724
          %s727 = sshll.u32 %s720, 4
          %s728 = int_to_ptr.vmem [resolvable:$true] %s727
          %730 = dma.hbm_to_vmem [thread:$0]  %s725, 16, %s728, %s718
        $region64: #{tpu_custom_call.1} parent=39 // pred_fallthru
          _
        // Predicated region
        $region65: #{tpu_custom_call.1} parent=39 // pred_check
          %p731 = pneg %p267
        $region66: #{tpu_custom_call.1} parent=39 // pred_check_branch
          %733 = sbr.rel (%p731) target = $region68
        $region67: #{tpu_custom_call.1} parent=39 // pred_region
          %s734 = sand.u32 %s37, 1
          %s735 = scalar_lea.sflag [#allocation4], %s734
          %s736 = sand.u32 %s257, 1
          %s737 = scalar_lea.vmem [#allocation13], %s736
          %s739 = ssub.s32 16, 16
          %740 = vsyncadd %s735, %s739
          %s741 = smul.addr %s45, 16
          %s742 = scalar_lea.hbm %s8, %s741
          %s744 = sshll.u32 %s737, 4
          %s745 = int_to_ptr.vmem [resolvable:$true] %s744
          %747 = dma.hbm_to_vmem [thread:$0]  %s742, 16, %s745, %s735
        $region68: #{tpu_custom_call.1} parent=39 // pred_fallthru
          _
        // Predicated region
        $region69: #{tpu_custom_call.1} parent=39 // pred_check
          %p748 = pneg %p293
        $region70: #{tpu_custom_call.1} parent=39 // pred_check_branch
          %750 = sbr.rel (%p748) target = $region72
        $region71: #{tpu_custom_call.1} parent=39 // pred_region
          %s751 = sand.u32 %s37, 1
          %s752 = scalar_lea.sflag [#allocation7], %s751
          %s753 = sand.u32 %s283, 1
          %s754 = scalar_lea.vmem [#allocation14], %s753
          %s756 = ssub.s32 16, 16
          %757 = vsyncadd %s752, %s756
          %s758 = smul.addr %s45, 16
          %s759 = scalar_lea.hbm %s9, %s758
          %s761 = sshll.u32 %s754, 4
          %s762 = int_to_ptr.vmem [resolvable:$true] %s761
          %764 = dma.hbm_to_vmem [thread:$0]  %s759, 16, %s762, %s752
        $region72: #{tpu_custom_call.1} parent=39 // pred_fallthru
          _
        // Predicated region
        $region73: #{tpu_custom_call.1} parent=39 // pred_check
          %p765 = pneg %p319
        $region74: #{tpu_custom_call.1} parent=39 // pred_check_branch
          %767 = sbr.rel (%p765) target = $region76
        $region75: #{tpu_custom_call.1} parent=39 // pred_region
          %s768 = sand.u32 %s37, 1
          %s769 = scalar_lea.sflag [#allocation4], %s768
          %s770 = sand.u32 %s309, 1
          %s771 = smul.addr %s770, 32
          %s772 = scalar_lea.vmem [#allocation15], %s771
          %s774 = ssub.s32 512, 512
          %775 = vsyncadd %s769, %s774
          %s776 = smul.addr %s45, 8
          %s777 = smul.addr %s776, 64
          %s778 = scalar_lea.hbm %s10, %s777
          %s779 = sshll.u32 %s772, 4
          %s780 = int_to_ptr.vmem [resolvable:$true] %s779
          %785 = dma.hbm_to_vmem [thread:$0]  %s778, 512, %s780, %s769, 64, 64, 4
        $region76: #{tpu_custom_call.1} parent=39 // pred_fallthru
          _
        // Predicated region
        $region77: #{tpu_custom_call.1} parent=39 // pred_check
          %p786 = pneg %p345
        $region78: #{tpu_custom_call.1} parent=39 // pred_check_branch
          %788 = sbr.rel (%p786) target = $region80
        $region79: #{tpu_custom_call.1} parent=39 // pred_region
          %s789 = sand.u32 %s37, 1
          %s790 = scalar_lea.sflag [#allocation7], %s789
          %s791 = sand.u32 %s335, 1
          %s792 = scalar_lea.vmem [#allocation16], %s791
          %s794 = ssub.s32 16, 16
          %795 = vsyncadd %s790, %s794
          %s796 = smul.addr %s45, 16
          %s797 = scalar_lea.hbm %s11, %s796
          %s799 = sshll.u32 %s792, 4
          %s800 = int_to_ptr.vmem [resolvable:$true] %s799
          %802 = dma.hbm_to_vmem [thread:$0]  %s797, 16, %s800, %s790
        $region80: #{tpu_custom_call.1} parent=39 // pred_fallthru
          _
        // Predicated region
        $region81: #{tpu_custom_call.1} parent=39 // pred_check
          %p803 = pneg %p371
        $region82: #{tpu_custom_call.1} parent=39 // pred_check_branch
          %805 = sbr.rel (%p803) target = $region84
        $region83: #{tpu_custom_call.1} parent=39 // pred_region
          %p806 = scmp.lt.s32.totalorder %s45, 1
          %s807 = scalar_select %p806, %s45, 1
          %s808 = smul.addr %s807, 16
          %s809 = smul.addr %s808, 4
          %s810 = scalar_lea.vmem %s12, %s809
        $region84: #{tpu_custom_call.1} parent=39 // pred_fallthru
          _
        // Predicated region
        $region85: #{tpu_custom_call.1} parent=39 // pred_check
          %p811 = pneg %p397
        $region86: #{tpu_custom_call.1} parent=39 // pred_check_branch
          %813 = sbr.rel (%p811) target = $region88
        $region87: #{tpu_custom_call.1} parent=39 // pred_region
          %s814 = sand.u32 %s37, 1
          %s815 = scalar_lea.sflag [#allocation4], %s814
          %s816 = sand.u32 %s387, 1
          %s817 = scalar_lea.vmem [#allocation17], %s816
          %s819 = ssub.s32 16, 16
          %820 = vsyncadd %s815, %s819
          %s821 = smul.addr %s45, 16
          %s822 = scalar_lea.hbm %s13, %s821
          %s824 = sshll.u32 %s817, 4
          %s825 = int_to_ptr.vmem [resolvable:$true] %s824
          %827 = dma.hbm_to_vmem [thread:$0]  %s822, 16, %s825, %s815
        $region88: #{tpu_custom_call.1} parent=39 // pred_fallthru
          _
        // Predicated region
        $region89: #{tpu_custom_call.1} parent=39 // pred_check
          %p828 = pneg %p423
        $region90: #{tpu_custom_call.1} parent=39 // pred_check_branch
          %830 = sbr.rel (%p828) target = $region92
        $region91: #{tpu_custom_call.1} parent=39 // pred_region
          %s831 = sand.u32 %s37, 1
          %s832 = scalar_lea.sflag [#allocation7], %s831
          %s833 = sand.u32 %s413, 1
          %s834 = scalar_lea.vmem [#allocation18], %s833
          %s836 = ssub.s32 16, 16
          %837 = vsyncadd %s832, %s836
          %s838 = smul.addr %s45, 16
          %s839 = scalar_lea.hbm %s14, %s838
          %s841 = sshll.u32 %s834, 4
          %s842 = int_to_ptr.vmem [resolvable:$true] %s841
          %844 = dma.hbm_to_vmem [thread:$0]  %s839, 16, %s842, %s832
        $region92: #{tpu_custom_call.1} parent=39 // pred_fallthru
          _
        // Predicated region
        $region93: #{tpu_custom_call.1} parent=39 // pred_check
          %p845 = pneg %p449
        $region94: #{tpu_custom_call.1} parent=39 // pred_check_branch
          %847 = sbr.rel (%p845) target = $region96
        $region95: #{tpu_custom_call.1} parent=39 // pred_region
          %s848 = sand.u32 %s37, 1
          %s849 = scalar_lea.sflag [#allocation4], %s848
          %s850 = sand.u32 %s439, 1
          %s851 = scalar_lea.vmem [#allocation19], %s850
          %s853 = ssub.s32 16, 16
          %854 = vsyncadd %s849, %s853
          %s855 = smul.addr %s45, 16
          %s856 = scalar_lea.hbm %s15, %s855
          %s858 = sshll.u32 %s851, 4
          %s859 = int_to_ptr.vmem [resolvable:$true] %s858
          %861 = dma.hbm_to_vmem [thread:$0]  %s856, 16, %s859, %s849
        $region96: #{tpu_custom_call.1} parent=39 // pred_fallthru
          _
      $region40: #{tpu_custom_call.1} parent=5 // pred_fallthru
        _
      %p862 = scmp.le.s32.totalorder 1, %s37
      %p863 = scmp.lt.s32.totalorder %s37, 5
      %p864 = pnand %p862, %p863
      %p865 = pneg %p864
      // Predicated region
      $region97: #{tpu_custom_call.1} parent=5 // pred_check
        _
      $region98: #{tpu_custom_call.1} parent=5 // pred_check_branch
        %867 = sbr.rel (%p864) target = $region100
      $region99: #{tpu_custom_call.1} parent=5 // pred_region
        %s868 = ssub.s32 %s37, 1
        %s869 = sand.u32 %s42, 1
        %s870 = scalar_lea.sflag [#allocation4], %s869
        %s871 = sand.u32 %s62, 1
        %s872 = smul.addr %s871, 8
        %s873 = scalar_lea.vmem [#allocation3], %s872
        // Predicated region
        $region101: #{tpu_custom_call.1} parent=99 // pred_check
          %p874 = pneg %p75
        $region102: #{tpu_custom_call.1} parent=99 // pred_check_branch
          %876 = sbr.rel (%p874) target = $region104
        $region103: #{tpu_custom_call.1} parent=99 // pred_region
          %877 = dma.done %s870, 128
        $region104: #{tpu_custom_call.1} parent=99 // pred_fallthru
          _
        %s878 = sand.u32 %s42, 1
        %s879 = scalar_lea.sflag [#allocation7], %s878
        %s880 = sand.u32 %s88, 1
        %s881 = scalar_lea.vmem [#allocation6], %s880
        // Predicated region
        $region105: #{tpu_custom_call.1} parent=99 // pred_check
          %p882 = pneg %p101
        $region106: #{tpu_custom_call.1} parent=99 // pred_check_branch
          %884 = sbr.rel (%p882) target = $region108
        $region107: #{tpu_custom_call.1} parent=99 // pred_region
          %885 = dma.done %s879, 16
        $region108: #{tpu_custom_call.1} parent=99 // pred_fallthru
          _
        // Predicated region
        $region109: #{tpu_custom_call.1} parent=99 // pred_check
          %p886 = pneg %p122
        $region110: #{tpu_custom_call.1} parent=99 // pred_check_branch
          %888 = sbr.rel (%p886) target = $region112
        $region111: #{tpu_custom_call.1} parent=99 // pred_region
          %889 = dma.done [#allocation7], 16
        $region112: #{tpu_custom_call.1} parent=99 // pred_fallthru
          _
        // Predicated region
        $region113: #{tpu_custom_call.1} parent=99 // pred_check
          %p890 = pneg %p143
        $region114: #{tpu_custom_call.1} parent=99 // pred_check_branch
          %892 = sbr.rel (%p890) target = $region116
        $region115: #{tpu_custom_call.1} parent=99 // pred_region
          %893 = dma.done [#allocation10], 16
        $region116: #{tpu_custom_call.1} parent=99 // pred_fallthru
          _
        %s894 = sand.u32 %s42, 1
        %s895 = scalar_lea.sflag [#allocation4], %s894
        %s896 = sand.u32 %s182, 1
        %s897 = smul.addr %s896, 2
        %s898 = scalar_lea.vmem [#allocation11], %s897
        // Predicated region
        $region117: #{tpu_custom_call.1} parent=99 // pred_check
          %p899 = pneg %p195
        $region118: #{tpu_custom_call.1} parent=99 // pred_check_branch
          %901 = sbr.rel (%p899) target = $region120
        $region119: #{tpu_custom_call.1} parent=99 // pred_region
          %902 = dma.done %s895, 32
        $region120: #{tpu_custom_call.1} parent=99 // pred_fallthru
          _
        %s903 = sand.u32 %s42, 1
        %s904 = scalar_lea.sflag [#allocation7], %s903
        %s905 = sand.u32 %s234, 1
        %s906 = scalar_lea.vmem [#allocation12], %s905
        // Predicated region
        $region121: #{tpu_custom_call.1} parent=99 // pred_check
          %p907 = pneg %p247
        $region122: #{tpu_custom_call.1} parent=99 // pred_check_branch
          %909 = sbr.rel (%p907) target = $region124
        $region123: #{tpu_custom_call.1} parent=99 // pred_region
          %910 = dma.done %s904, 16
        $region124: #{tpu_custom_call.1} parent=99 // pred_fallthru
          _
        %s911 = sand.u32 %s42, 1
        %s912 = scalar_lea.sflag [#allocation4], %s911
        %s913 = sand.u32 %s260, 1
        %s914 = scalar_lea.vmem [#allocation13], %s913
        // Predicated region
        $region125: #{tpu_custom_call.1} parent=99 // pred_check
          %p915 = pneg %p273
        $region126: #{tpu_custom_call.1} parent=99 // pred_check_branch
          %917 = sbr.rel (%p915) target = $region128
        $region127: #{tpu_custom_call.1} parent=99 // pred_region
          %918 = dma.done %s912, 16
        $region128: #{tpu_custom_call.1} parent=99 // pred_fallthru
          _
        %s919 = sand.u32 %s42, 1
        %s920 = scalar_lea.sflag [#allocation7], %s919
        %s921 = sand.u32 %s286, 1
        %s922 = scalar_lea.vmem [#allocation14], %s921
        // Predicated region
        $region129: #{tpu_custom_call.1} parent=99 // pred_check
          %p923 = pneg %p299
        $region130: #{tpu_custom_call.1} parent=99 // pred_check_branch
          %925 = sbr.rel (%p923) target = $region132
        $region131: #{tpu_custom_call.1} parent=99 // pred_region
          %926 = dma.done %s920, 16
        $region132: #{tpu_custom_call.1} parent=99 // pred_fallthru
          _
        %s927 = sand.u32 %s42, 1
        %s928 = scalar_lea.sflag [#allocation4], %s927
        %s929 = sand.u32 %s312, 1
        %s930 = smul.addr %s929, 32
        %s931 = scalar_lea.vmem [#allocation15], %s930
        // Predicated region
        $region133: #{tpu_custom_call.1} parent=99 // pred_check
          %p932 = pneg %p325
        $region134: #{tpu_custom_call.1} parent=99 // pred_check_branch
          %934 = sbr.rel (%p932) target = $region136
        $region135: #{tpu_custom_call.1} parent=99 // pred_region
          %935 = dma.done %s928, 512
        $region136: #{tpu_custom_call.1} parent=99 // pred_fallthru
          _
        %s936 = sand.u32 %s42, 1
        %s937 = scalar_lea.sflag [#allocation7], %s936
        %s938 = sand.u32 %s338, 1
        %s939 = scalar_lea.vmem [#allocation16], %s938
        // Predicated region
        $region137: #{tpu_custom_call.1} parent=99 // pred_check
          %p940 = pneg %p351
        $region138: #{tpu_custom_call.1} parent=99 // pred_check_branch
          %942 = sbr.rel (%p940) target = $region140
        $region139: #{tpu_custom_call.1} parent=99 // pred_region
          %943 = dma.done %s937, 16
        $region140: #{tpu_custom_call.1} parent=99 // pred_fallthru
          _
        %s944 = sand.u32 %s42, 1
        %s945 = scalar_lea.sflag [#allocation4], %s944
        %s946 = sand.u32 %s390, 1
        %s947 = scalar_lea.vmem [#allocation17], %s946
        // Predicated region
        $region141: #{tpu_custom_call.1} parent=99 // pred_check
          %p948 = pneg %p403
        $region142: #{tpu_custom_call.1} parent=99 // pred_check_branch
          %950 = sbr.rel (%p948) target = $region144
        $region143: #{tpu_custom_call.1} parent=99 // pred_region
          %951 = dma.done %s945, 16
        $region144: #{tpu_custom_call.1} parent=99 // pred_fallthru
          _
        %s952 = sand.u32 %s42, 1
        %s953 = scalar_lea.sflag [#allocation7], %s952
        %s954 = sand.u32 %s416, 1
        %s955 = scalar_lea.vmem [#allocation18], %s954
        // Predicated region
        $region145: #{tpu_custom_call.1} parent=99 // pred_check
          %p956 = pneg %p429
        $region146: #{tpu_custom_call.1} parent=99 // pred_check_branch
          %958 = sbr.rel (%p956) target = $region148
        $region147: #{tpu_custom_call.1} parent=99 // pred_region
          %959 = dma.done %s953, 16
        $region148: #{tpu_custom_call.1} parent=99 // pred_fallthru
          _
        %s960 = sand.u32 %s42, 1
        %s961 = scalar_lea.sflag [#allocation4], %s960
        %s962 = sand.u32 %s442, 1
        %s963 = scalar_lea.vmem [#allocation19], %s962
        // Predicated region
        $region149: #{tpu_custom_call.1} parent=99 // pred_check
          %p964 = pneg %p455
        $region150: #{tpu_custom_call.1} parent=99 // pred_check_branch
          %966 = sbr.rel (%p964) target = $region152
        $region151: #{tpu_custom_call.1} parent=99 // pred_region
          %967 = dma.done %s961, 16
        $region152: #{tpu_custom_call.1} parent=99 // pred_fallthru
          _
        // Predicated region
        $region153: #{tpu_custom_call.1} parent=99 // pred_check
          %p968 = pneg %p476
        $region154: #{tpu_custom_call.1} parent=99 // pred_check_branch
          %970 = sbr.rel (%p968) target = $region156
        $region155: #{tpu_custom_call.1} parent=99 // pred_region
          %971 = dma.done [#allocation7], 512
        $region156: #{tpu_custom_call.1} parent=99 // pred_fallthru
          _
        // Predicated region
        $region157: #{tpu_custom_call.1} parent=99 // pred_check
          %p972 = pneg %p497
        $region158: #{tpu_custom_call.1} parent=99 // pred_check_branch
          %974 = sbr.rel (%p972) target = $region160
        $region159: #{tpu_custom_call.1} parent=99 // pred_region
          %975 = dma.done [#allocation10], 16
        $region160: #{tpu_custom_call.1} parent=99 // pred_fallthru
          _
        // Predicated region
        $region161: #{tpu_custom_call.1} parent=99 // pred_check
          %p976 = pneg %p539
        $region162: #{tpu_custom_call.1} parent=99 // pred_check_branch
          %978 = sbr.rel (%p976) target = $region164
        $region163: #{tpu_custom_call.1} parent=99 // pred_region
          %979 = dma.done [#allocation23], 16
        $region164: #{tpu_custom_call.1} parent=99 // pred_fallthru
          _
        %s980 = sand.u32 %s42, 1
        %s981 = scalar_lea.sflag [#allocation4], %s980
        %s982 = sand.u32 %s62, 1
        %s983 = smul.addr %s982, 8
        %s984 = scalar_lea.vmem [#allocation3], %s983
        %p985 = pneg %p75
        %p986 = pneg %p72
        %s987 = sand.u32 %s42, 1
        %s988 = scalar_lea.sflag [#allocation7], %s987
        %s989 = sand.u32 %s88, 1
        %s990 = scalar_lea.vmem [#allocation6], %s989
        %p991 = pneg %p101
        %p992 = pneg %p98
        %p993 = pneg %p122
        %p994 = pneg %p119
        %p995 = pneg %p143
        %p996 = pneg %p140
        %p997 = scmp.lt.s32.totalorder %s47, 1
        %s998 = scalar_select %p997, %s47, 1
        %s999 = smul.addr %s998, 16
        %s1000 = smul.addr %s999, 4
        %s1001 = scalar_lea.vmem %s4, %s1000
        %p1002 = pneg %p169
        %p1003 = pneg %p166
        %s1004 = sand.u32 %s42, 1
        %s1005 = scalar_lea.sflag [#allocation4], %s1004
        %s1006 = sand.u32 %s182, 1
        %s1007 = smul.addr %s1006, 2
        %s1008 = scalar_lea.vmem [#allocation11], %s1007
        %p1009 = pneg %p195
        %p1010 = pneg %p192
        %p1011 = scmp.lt.s32.totalorder %s47, 1
        %s1012 = scalar_select %p1011, %s47, 1
        %s1013 = smul.addr %s1012, 8
        %s1014 = smul.addr %s1013, 4
        %s1015 = scalar_lea.vmem %s6, %s1014
        %p1016 = pneg %p221
        %p1017 = pneg %p218
        %s1018 = sand.u32 %s42, 1
        %s1019 = scalar_lea.sflag [#allocation7], %s1018
        %s1020 = sand.u32 %s234, 1
        %s1021 = scalar_lea.vmem [#allocation12], %s1020
        %p1022 = pneg %p247
        %p1023 = pneg %p244
        %s1024 = sand.u32 %s42, 1
        %s1025 = scalar_lea.sflag [#allocation4], %s1024
        %s1026 = sand.u32 %s260, 1
        %s1027 = scalar_lea.vmem [#allocation13], %s1026
        %p1028 = pneg %p273
        %p1029 = pneg %p270
        %s1030 = sand.u32 %s42, 1
        %s1031 = scalar_lea.sflag [#allocation7], %s1030
        %s1032 = sand.u32 %s286, 1
        %s1033 = scalar_lea.vmem [#allocation14], %s1032
        %p1034 = pneg %p299
        %p1035 = pneg %p296
        %s1036 = sand.u32 %s42, 1
        %s1037 = scalar_lea.sflag [#allocation4], %s1036
        %s1038 = sand.u32 %s312, 1
        %s1039 = smul.addr %s1038, 32
        %s1040 = scalar_lea.vmem [#allocation15], %s1039
        %p1041 = pneg %p325
        %p1042 = pneg %p322
        %s1043 = sand.u32 %s42, 1
        %s1044 = scalar_lea.sflag [#allocation7], %s1043
        %s1045 = sand.u32 %s338, 1
        %s1046 = scalar_lea.vmem [#allocation16], %s1045
        %p1047 = pneg %p351
        %p1048 = pneg %p348
        %p1049 = scmp.lt.s32.totalorder %s47, 1
        %s1050 = scalar_select %p1049, %s47, 1
        %s1051 = smul.addr %s1050, 16
        %s1052 = smul.addr %s1051, 4
        %s1053 = scalar_lea.vmem %s12, %s1052
        %p1054 = pneg %p377
        %p1055 = pneg %p374
        %s1056 = sand.u32 %s42, 1
        %s1057 = scalar_lea.sflag [#allocation4], %s1056
        %s1058 = sand.u32 %s390, 1
        %s1059 = scalar_lea.vmem [#allocation17], %s1058
        %p1060 = pneg %p403
        %p1061 = pneg %p400
        %s1062 = sand.u32 %s42, 1
        %s1063 = scalar_lea.sflag [#allocation7], %s1062
        %s1064 = sand.u32 %s416, 1
        %s1065 = scalar_lea.vmem [#allocation18], %s1064
        %p1066 = pneg %p429
        %p1067 = pneg %p426
        %s1068 = sand.u32 %s42, 1
        %s1069 = scalar_lea.sflag [#allocation4], %s1068
        %s1070 = sand.u32 %s442, 1
        %s1071 = scalar_lea.vmem [#allocation19], %s1070
        %p1072 = pneg %p455
        %p1073 = pneg %p452
        %p1074 = pneg %p476
        %p1075 = pneg %p473
        %p1076 = pneg %p497
        %p1077 = pneg %p494
        %p1078 = pneg %p518
        %p1079 = pneg %p515
        %p1080 = pneg %p539
        %p1081 = pneg %p536
        %p1082 = pneg %p565
        %p1083 = pneg %p562
        %s1084 = sand.u32 %s552, 1
        %s1085 = scalar_lea.sflag [#allocation5], %s1084
        %s1086 = sand.u32 %s552, 1
        %s1087 = smul.addr %s1086, 8
        %s1088 = scalar_lea.vmem [#allocation24], %s1087
        %p1089 = scmp.lt.s32.totalorder %s47, 1
        %s1090 = scalar_select %p1089, %s47, 1
        %s1091 = smul.addr %s1090, 16
        %s1092 = smul.addr %s1091, 4
        %s1093 = scalar_lea.vmem %s4, %s1092
        %p1094 = scmp.lt.s32.totalorder %s47, 1
        %s1095 = scalar_select %p1094, %s47, 1
        %s1096 = smul.addr %s1095, 8
        %s1097 = smul.addr %s1096, 4
        %s1098 = scalar_lea.vmem %s6, %s1097
        %p1099 = scmp.lt.s32.totalorder %s47, 1
        %s1100 = scalar_select %p1099, %s47, 1
        %s1101 = smul.addr %s1100, 16
        %s1102 = smul.addr %s1101, 4
        %s1103 = scalar_lea.vmem %s12, %s1102
        %p1105 = scmp.eq.s32.totalorder %s47, 0
        // Predicated region
        $region165: #{tpu_custom_call.1} parent=99 // pred_check
          %p1106 = pneg %p1105
        $region166: #{tpu_custom_call.1} parent=99 // pred_check_branch
          %1108 = sbr.rel (%p1106) target = $region168
        $region167: #{tpu_custom_call.1} parent=99 // pred_region
          %v1109 = vld [vmem:[%s873] sm:$0xff]
          %v1110 = vld [vmem:[#allocation8] sm:$0x1]
          %v1111 = vld [vmem:[#allocation9] sm:$0x1]
          %vm1112 = vcmask 523264
          %v1113 = vsel %vm1112, %v1109, 0.0
          %1114 = vadd.xlane.f32.xlu0 %v1113
          %v1115 = vpop.xlane.xlu0 %1114
          %v1116 = vrcp.pop 64.0
          %v1117 = vmul.f32 %v1115, %v1116
          %v1118 = vsub.f32 %v1109, %v1117
          %v1119 = vmul.f32 %v1118, %v1118
          %v1120 = vsel %vm1112, %v1119, 0.0
          %1121 = vadd.xlane.f32.xlu0 %v1120
          %v1122 = vpop.xlane.xlu0 %1121
          %v1123 = vmul.f32 %v1122, %v1116
          %v1124 = vadd.f32 %v1123, 1e-12
          %v1125 = vrsqrt.pop %v1124
          %v1126 = vmul.f32 %v1118, %v1125
          %v1128 = vlaneseq
          %v1129 = vshrl.u32 %v1128, 7
          %v1130 = vsub.s32 0, %v1129
          %v1131 = vrot.slane %v1110, %v1130
          %v1133 = vmul.f32 %v1126, %v1131
          %v1135 = vlaneseq
          %v1136 = vshrl.u32 %v1135, 7
          %v1137 = vsub.s32 0, %v1136
          %v1138 = vrot.slane %v1111, %v1137
          %v1140 = vadd.f32 %v1133, %v1138
          %v1141 = vpack.c.bf16 %v1140, %v1140
          %vm1142 = vcmask 519168
          %1143 = vst.msk [vmem:[#allocation2] sm:$0xf] %vm1142, %v1141
        $region168: #{tpu_custom_call.1} parent=99 // pred_fallthru
          _
        %v1144 = vld [vmem:[#allocation2] sm:$0xf]
        %v1145 = vunpack.c.l.bf16 %v1144
        %v1146 = vld [vmem:[%s881] sm:$0x1]
        %v1147 = vld [vmem:[%s1093] sm:$0xff]
        %v1148 = vld [vmem:[%s1093 + $0x8] sm:$0xff]
        %v1149 = vld [vmem:[%s1093 + $0x10] sm:$0xff]
        %v1150 = vld [vmem:[%s1093 + $0x18] sm:$0xff]
        %v1151 = vld [vmem:[%s1093 + $0x20] sm:$0xff]
        %v1152 = vld [vmem:[%s1093 + $0x28] sm:$0xff]
        %v1153 = vld [vmem:[%s1093 + $0x30] sm:$0xff]
        %v1154 = vld [vmem:[%s1093 + $0x38] sm:$0xff]
        %v1155 = vld [vmem:[%s898] sm:$0x3]
        %v1157 = vlaneseq
        %v1158 = vshrl.u32 %v1157, 7
        %v1159 = vsub.s32 0, %v1158
        %v1160 = vrot.slane %v1155, %v1159
        %v1161 = vlaneseq
        %v1162 = vshrl.u32 %v1161, 7
        %v1163 = vsub.s32 1, %v1162
        %v1164 = vrot.slane %v1155, %v1163
        %v1175 = vunpack.c.l.b16 %v1147
        %v1176 = vunpack.c.h.b16 %v1147
        %v1177 = vunpack.c.l.b16 %v1148
        %v1178 = vunpack.c.h.b16 %v1148
        %v1179 = vunpack.c.l.b16 %v1149
        %v1180 = vunpack.c.h.b16 %v1149
        %v1181 = vunpack.c.l.b16 %v1150
        %v1182 = vunpack.c.h.b16 %v1150
        %v1183 = vunpack.c.l.b16 %v1151
        %v1184 = vunpack.c.h.b16 %v1151
        %v1185 = vunpack.c.l.b16 %v1152
        %v1186 = vunpack.c.h.b16 %v1152
        %v1187 = vunpack.c.l.b16 %v1153
        %v1188 = vunpack.c.h.b16 %v1153
        %v1189 = vunpack.c.l.b16 %v1154
        %v1190 = vunpack.c.h.b16 %v1154
        %v1191 = vpack.c.b16 %v1177, %v1175
        %v1192 = vpack.c.b16 %v1178, %v1176
        %v1193 = vpack.c.b16 %v1181, %v1179
        %v1194 = vpack.c.b16 %v1182, %v1180
        %v1195 = vpack.c.b16 %v1185, %v1183
        %v1196 = vpack.c.b16 %v1186, %v1184
        %v1197 = vpack.c.b16 %v1189, %v1187
        %v1198 = vpack.c.b16 %v1190, %v1188
        %vm1207 = vcmask 523264
        %v1209 = vsel %vm1207, %v1144, 0
        %1211 = vmatprep.subr.bf16.mxu0 0
        %1212 = vmatpush1.bf16.msra.mxu0 0
        %1213 = vmatprep.subr.bf16.mxu0 0
        %1214 = vmatpush1.bf16.msra.mxu0 0
        %1215 = vmatprep.subr.bf16.mxu0 0
        %1216 = vmatpush1.bf16.msra.mxu0 0
        %1217 = vmatprep.subr.bf16.mxu0 0
        %1218 = vmatpush1.bf16.msra.mxu0 0
        %1219 = vmatprep.subr.bf16.mxu0 %v1198
        %1220 = vmatpush1.bf16.msra.mxu0 %v1197
        %1221 = vmatprep.subr.bf16.mxu0 %v1196
        %1222 = vmatpush1.bf16.msra.mxu0 %v1195
        %1223 = vmatprep.subr.bf16.mxu0 %v1194
        %1224 = vmatpush1.bf16.msra.mxu0 %v1193
        %1225 = vmatprep.subr.bf16.mxu0 %v1192
        %1226 = vmatpush1.bf16.msra.mxu0 %v1191
        %1227 = vmatprep.subr.bf16.mxu0 0
        %1228 = vmatpush2.bf16.msra.mxu0 0
        %1229 = vmatprep.subr.bf16.mxu0 0
        %1230 = vmatpush2.bf16.msra.mxu0 0
        %1231 = vmatprep.subr.bf16.mxu0 0
        %1232 = vmatpush2.bf16.msra.mxu0 0
        %1233 = vmatprep.subr.bf16.mxu0 0
        %1234 = vmatpush2.bf16.msra.mxu0 0
        %1235 = vmatprep.subr.bf16.mxu0 0
        %1236 = vmatpush2.bf16.msra.mxu0 0
        %1237 = vmatprep.subr.bf16.mxu0 0
        %1238 = vmatpush2.bf16.msra.mxu0 0
        %1239 = vmatprep.subr.bf16.mxu0 0
        %1240 = vmatpush2.bf16.msra.mxu0 0
        %1241 = vmatprep.subr.bf16.mxu0 0
        %1242 = vmatpush2.bf16.msra.mxu0 0
        %1243 = vmatprep.mubr.bf16.mxu0 0
        %1244 = vmatmul.mubr.bf16.gmra.mxu0 %v1209
        %v1245 = vpop.f32.mrf.mxu0
        %v1246 = vadd.f32 %v1160, %v1245
        %v1247 = vpop.f32.mrf.mxu0
        %v1248 = vadd.f32 %v1164, %v1247
        %v1249 = vpop.f32.mrf.mxu0
        %v1250 = vpop.f32.mrf.mxu0
        %1251 = vdwg.mxu0
        %v1252 = vpack.c.bf16 %v1246, %v1246
        %v1253 = vpack.c.bf16 %v1248, %v1248
        %1255 = vrot.lane.b32.xlu0 %v1252, 64
        %v1256 = vpop.permute.xlu0 %1255
        %vm1257 = vcmask 130048
        %v1259 = vsel %vm1257, %v1252, 0
        %v1262 = vsel %vm1257, %v1256, 0
        %1264 = vmatprep.subr.bf16.mxu0 0
        %1265 = vmatpush1.bf16.xpose.msra.mxu0 0
        %1266 = vmatprep.subr.bf16.mxu0 0
        %1267 = vmatpush1.bf16.xpose.msra.mxu0 0
        %1268 = vmatprep.subr.bf16.mxu0 0
        %1269 = vmatpush1.bf16.xpose.msra.mxu0 0
        %1270 = vmatprep.subr.bf16.mxu0 0
        %1271 = vmatpush1.bf16.xpose.msra.mxu0 0
        %1272 = vmatprep.subr.bf16.mxu0 0
        %1273 = vmatpush1.bf16.xpose.msra.mxu0 0
        %1274 = vmatprep.subr.bf16.mxu0 0
        %1275 = vmatpush1.bf16.xpose.msra.mxu0 0
        %1276 = vmatprep.subr.bf16.mxu0 0
        %1277 = vmatpush1.bf16.xpose.msra.mxu0 0
        %1278 = vmatprep.subr.bf16.mxu0 0
        %1279 = vmatpush1.bf16.xpose.msra.mxu0 %v1262
        %1280 = vmatprep.subr.bf16.mxu0 0
        %1281 = vmatpush2.bf16.xpose.msra.mxu0 0
        %1282 = vmatprep.subr.bf16.mxu0 0
        %1283 = vmatpush2.bf16.xpose.msra.mxu0 0
        %1284 = vmatprep.subr.bf16.mxu0 0
        %1285 = vmatpush2.bf16.xpose.msra.mxu0 0
        %1286 = vmatprep.subr.bf16.mxu0 0
        %1287 = vmatpush2.bf16.xpose.msra.mxu0 0
        %1288 = vmatprep.subr.bf16.mxu0 0
        %1289 = vmatpush2.bf16.xpose.msra.mxu0 0
        %1290 = vmatprep.subr.bf16.mxu0 0
        %1291 = vmatpush2.bf16.xpose.msra.mxu0 0
        %1292 = vmatprep.subr.bf16.mxu0 0
        %1293 = vmatpush2.bf16.xpose.msra.mxu0 0
        %1294 = vmatprep.subr.bf16.mxu0 0
        %1295 = vmatpush2.bf16.xpose.msra.mxu0 0
        %1296 = vmatprep.mubr.bf16.mxu0 0
        %1297 = vmatmul.mubr.bf16.gmra.mxu0 %v1259
        %v1298 = vpop.f32.mrf.mxu0
        %v1299 = vadd.f32 0.0, %v1298
        %v1300 = vpop.f32.mrf.mxu0
        %v1301 = vpop.f32.mrf.mxu0
        %v1302 = vpop.f32.mrf.mxu0
        %1303 = vdwg.mxu0
        %v1304 = vmul.f32 %v1299, 0.25
        %v1306 = vlaneseq
        %v1307 = vshrl.u32 %v1306, 7
        %v1308 = vsub.s32 0, %v1307
        %v1309 = vrot.slane %v1146, %v1308
        %v1311 = vadd.f32 %v1304, %v1309
        %vm1312 = vcmask 64512
        %v1313 = vsel %vm1312, %v1311, -inf
        %1314 = vmax.xlane.f32.xlu0 %v1313
        %v1315 = vpop.xlane.xlu0 %1314
        %v1316 = vsub.f32 %v1311, %v1315
        %v1317 = vmul.f32 %v1316, 1.442695
        %v1318 = vpow.pop %v1317
        %v1319 = vsel %vm1312, %v1318, 0.0
        %1320 = vadd.xlane.f32.xlu0 %v1319
        %v1321 = vpop.xlane.xlu0 %1320
        %v1322 = vrcp.pop %v1321
        %v1323 = vmul.f32 %v1318, %v1322
        %v1324 = vpack.c.bf16 %v1323, %v1323
        %v1326 = vsel %vm1312, %v1324, 0
        %vm1328 = vcmask 1043456
        %v1330 = vsel %vm1328, %v1253, 0
        %1332 = vmatprep.subr.bf16.mxu0 0
        %1333 = vmatpush1.bf16.msra.mxu0 0
        %1334 = vmatprep.subr.bf16.mxu0 0
        %1335 = vmatpush1.bf16.msra.mxu0 0
        %1336 = vmatprep.subr.bf16.mxu0 0
        %1337 = vmatpush1.bf16.msra.mxu0 0
        %1338 = vmatprep.subr.bf16.mxu0 0
        %1339 = vmatpush1.bf16.msra.mxu0 0
        %1340 = vmatprep.subr.bf16.mxu0 0
        %1341 = vmatpush1.bf16.msra.mxu0 0
        %1342 = vmatprep.subr.bf16.mxu0 0
        %1343 = vmatpush1.bf16.msra.mxu0 0
        %1344 = vmatprep.subr.bf16.mxu0 0
        %1345 = vmatpush1.bf16.msra.mxu0 0
        %1346 = vmatprep.subr.bf16.mxu0 0
        %1347 = vmatpush1.bf16.msra.mxu0 %v1330
        %1348 = vmatprep.subr.bf16.mxu0 0
        %1349 = vmatpush2.bf16.msra.mxu0 0
        %1350 = vmatprep.subr.bf16.mxu0 0
        %1351 = vmatpush2.bf16.msra.mxu0 0
        %1352 = vmatprep.subr.bf16.mxu0 0
        %1353 = vmatpush2.bf16.msra.mxu0 0
        %1354 = vmatprep.subr.bf16.mxu0 0
        %1355 = vmatpush2.bf16.msra.mxu0 0
        %1356 = vmatprep.subr.bf16.mxu0 0
        %1357 = vmatpush2.bf16.msra.mxu0 0
        %1358 = vmatprep.subr.bf16.mxu0 0
        %1359 = vmatpush2.bf16.msra.mxu0 0
        %1360 = vmatprep.subr.bf16.mxu0 0
        %1361 = vmatpush2.bf16.msra.mxu0 0
        %1362 = vmatprep.subr.bf16.mxu0 0
        %1363 = vmatpush2.bf16.msra.mxu0 0
        %1364 = vmatprep.mubr.bf16.mxu0 0
        %1365 = vmatmul.mubr.bf16.gmra.mxu0 %v1326
        %v1366 = vpop.f32.mrf.mxu0
        %v1367 = vadd.f32 0.0, %v1366
        %v1368 = vpop.f32.mrf.mxu0
        %v1369 = vpop.f32.mrf.mxu0
        %v1370 = vpop.f32.mrf.mxu0
        %1371 = vdwg.mxu0
        %1372 = vrot.lane.b32.xlu0 %v1252, 112
        %v1373 = vpop.permute.xlu0 %1372
        %1374 = vrot.lane.b32.xlu0 %v1252, 48
        %v1375 = vpop.permute.xlu0 %1374
        %v1377 = vsel %vm1257, %v1373, 0
        %v1380 = vsel %vm1257, %v1375, 0
        %1382 = vmatprep.subr.bf16.mxu0 0
        %1383 = vmatpush1.bf16.xpose.msra.mxu0 0
        %1384 = vmatprep.subr.bf16.mxu0 0
        %1385 = vmatpush1.bf16.xpose.msra.mxu0 0
        %1386 = vmatprep.subr.bf16.mxu0 0
        %1387 = vmatpush1.bf16.xpose.msra.mxu0 0
        %1388 = vmatprep.subr.bf16.mxu0 0
        %1389 = vmatpush1.bf16.xpose.msra.mxu0 0
        %1390 = vmatprep.subr.bf16.mxu0 0
        %1391 = vmatpush1.bf16.xpose.msra.mxu0 0
        %1392 = vmatprep.subr.bf16.mxu0 0
        %1393 = vmatpush1.bf16.xpose.msra.mxu0 0
        %1394 = vmatprep.subr.bf16.mxu0 0
        %1395 = vmatpush1.bf16.xpose.msra.mxu0 0
        %1396 = vmatprep.subr.bf16.mxu0 0
        %1397 = vmatpush1.bf16.xpose.msra.mxu0 %v1380
        %1398 = vmatprep.subr.bf16.mxu0 0
        %1399 = vmatpush2.bf16.xpose.msra.mxu0 0
        %1400 = vmatprep.subr.bf16.mxu0 0
        %1401 = vmatpush2.bf16.xpose.msra.mxu0 0
        %1402 = vmatprep.subr.bf16.mxu0 0
        %1403 = vmatpush2.bf16.xpose.msra.mxu0 0
        %1404 = vmatprep.subr.bf16.mxu0 0
        %1405 = vmatpush2.bf16.xpose.msra.mxu0 0
        %1406 = vmatprep.subr.bf16.mxu0 0
        %1407 = vmatpush2.bf16.xpose.msra.mxu0 0
        %1408 = vmatprep.subr.bf16.mxu0 0
        %1409 = vmatpush2.bf16.xpose.msra.mxu0 0
        %1410 = vmatprep.subr.bf16.mxu0 0
        %1411 = vmatpush2.bf16.xpose.msra.mxu0 0
        %1412 = vmatprep.subr.bf16.mxu0 0
        %1413 = vmatpush2.bf16.xpose.msra.mxu0 0
        %1414 = vmatprep.mubr.bf16.mxu0 0
        %1415 = vmatmul.mubr.bf16.gmra.mxu0 %v1377
        %v1416 = vpop.f32.mrf.mxu0
        %v1417 = vadd.f32 0.0, %v1416
        %v1418 = vpop.f32.mrf.mxu0
        %v1419 = vpop.f32.mrf.mxu0
        %v1420 = vpop.f32.mrf.mxu0
        %1421 = vdwg.mxu0
        %v1422 = vmul.f32 %v1417, 0.25
        %v1423 = vadd.f32 %v1422, %v1309
        %v1424 = vsel %vm1312, %v1423, -inf
        %1425 = vmax.xlane.f32.xlu0 %v1424
        %v1426 = vpop.xlane.xlu0 %1425
        %v1427 = vsub.f32 %v1423, %v1426
        %v1428 = vmul.f32 %v1427, 1.442695
        %v1429 = vpow.pop %v1428
        %v1430 = vsel %vm1312, %v1429, 0.0
        %1431 = vadd.xlane.f32.xlu0 %v1430
        %v1432 = vpop.xlane.xlu0 %1431
        %v1433 = vrcp.pop %v1432
        %v1434 = vmul.f32 %v1429, %v1433
        %v1435 = vpack.c.bf16 %v1434, %v1434
        %1437 = vrot.lane.b32.xlu0 %v1253, 112
        %v1438 = vpop.permute.xlu0 %1437
        %v1440 = vsel %vm1312, %v1435, 0
        %v1443 = vsel %vm1328, %v1438, 0
        %1445 = vmatprep.subr.bf16.mxu0 0
        %1446 = vmatpush1.bf16.msra.mxu0 0
        %1447 = vmatprep.subr.bf16.mxu0 0
        %1448 = vmatpush1.bf16.msra.mxu0 0
        %1449 = vmatprep.subr.bf16.mxu0 0
        %1450 = vmatpush1.bf16.msra.mxu0 0
        %1451 = vmatprep.subr.bf16.mxu0 0
        %1452 = vmatpush1.bf16.msra.mxu0 0
        %1453 = vmatprep.subr.bf16.mxu0 0
        %1454 = vmatpush1.bf16.msra.mxu0 0
        %1455 = vmatprep.subr.bf16.mxu0 0
        %1456 = vmatpush1.bf16.msra.mxu0 0
        %1457 = vmatprep.subr.bf16.mxu0 0
        %1458 = vmatpush1.bf16.msra.mxu0 0
        %1459 = vmatprep.subr.bf16.mxu0 0
        %1460 = vmatpush1.bf16.msra.mxu0 %v1443
        %1461 = vmatprep.subr.bf16.mxu0 0
        %1462 = vmatpush2.bf16.msra.mxu0 0
        %1463 = vmatprep.subr.bf16.mxu0 0
        %1464 = vmatpush2.bf16.msra.mxu0 0
        %1465 = vmatprep.subr.bf16.mxu0 0
        %1466 = vmatpush2.bf16.msra.mxu0 0
        %1467 = vmatprep.subr.bf16.mxu0 0
        %1468 = vmatpush2.bf16.msra.mxu0 0
        %1469 = vmatprep.subr.bf16.mxu0 0
        %1470 = vmatpush2.bf16.msra.mxu0 0
        %1471 = vmatprep.subr.bf16.mxu0 0
        %1472 = vmatpush2.bf16.msra.mxu0 0
        %1473 = vmatprep.subr.bf16.mxu0 0
        %1474 = vmatpush2.bf16.msra.mxu0 0
        %1475 = vmatprep.subr.bf16.mxu0 0
        %1476 = vmatpush2.bf16.msra.mxu0 0
        %1477 = vmatprep.mubr.bf16.mxu0 0
        %1478 = vmatmul.mubr.bf16.gmra.mxu0 %v1440
        %v1479 = vpop.f32.mrf.mxu0
        %v1480 = vadd.f32 0.0, %v1479
        %v1481 = vpop.f32.mrf.mxu0
        %v1482 = vpop.f32.mrf.mxu0
        %v1483 = vpop.f32.mrf.mxu0
        %1484 = vdwg.mxu0
        %1485 = vrot.lane.b32.xlu0 %v1252, 96
        %v1486 = vpop.permute.xlu0 %1485
        %1487 = vrot.lane.b32.xlu0 %v1252, 32
        %v1488 = vpop.permute.xlu0 %1487
        %v1490 = vsel %vm1257, %v1486, 0
        %v1493 = vsel %vm1257, %v1488, 0
        %1495 = vmatprep.subr.bf16.mxu0 0
        %1496 = vmatpush1.bf16.xpose.msra.mxu0 0
        %1497 = vmatprep.subr.bf16.mxu0 0
        %1498 = vmatpush1.bf16.xpose.msra.mxu0 0
        %1499 = vmatprep.subr.bf16.mxu0 0
        %1500 = vmatpush1.bf16.xpose.msra.mxu0 0
        %1501 = vmatprep.subr.bf16.mxu0 0
        %1502 = vmatpush1.bf16.xpose.msra.mxu0 0
        %1503 = vmatprep.subr.bf16.mxu0 0
        %1504 = vmatpush1.bf16.xpose.msra.mxu0 0
        %1505 = vmatprep.subr.bf16.mxu0 0
        %1506 = vmatpush1.bf16.xpose.msra.mxu0 0
        %1507 = vmatprep.subr.bf16.mxu0 0
        %1508 = vmatpush1.bf16.xpose.msra.mxu0 0
        %1509 = vmatprep.subr.bf16.mxu0 0
        %1510 = vmatpush1.bf16.xpose.msra.mxu0 %v1493
        %1511 = vmatprep.subr.bf16.mxu0 0
        %1512 = vmatpush2.bf16.xpose.msra.mxu0 0
        %1513 = vmatprep.subr.bf16.mxu0 0
        %1514 = vmatpush2.bf16.xpose.msra.mxu0 0
        %1515 = vmatprep.subr.bf16.mxu0 0
        %1516 = vmatpush2.bf16.xpose.msra.mxu0 0
        %1517 = vmatprep.subr.bf16.mxu0 0
        %1518 = vmatpush2.bf16.xpose.msra.mxu0 0
        %1519 = vmatprep.subr.bf16.mxu0 0
        %1520 = vmatpush2.bf16.xpose.msra.mxu0 0
        %1521 = vmatprep.subr.bf16.mxu0 0
        %1522 = vmatpush2.bf16.xpose.msra.mxu0 0
        %1523 = vmatprep.subr.bf16.mxu0 0
        %1524 = vmatpush2.bf16.xpose.msra.mxu0 0
        %1525 = vmatprep.subr.bf16.mxu0 0
        %1526 = vmatpush2.bf16.xpose.msra.mxu0 0
        %1527 = vmatprep.mubr.bf16.mxu0 0
        %1528 = vmatmul.mubr.bf16.gmra.mxu0 %v1490
        %v1529 = vpop.f32.mrf.mxu0
        %v1530 = vadd.f32 0.0, %v1529
        %v1531 = vpop.f32.mrf.mxu0
        %v1532 = vpop.f32.mrf.mxu0
        %v1533 = vpop.f32.mrf.mxu0
        %1534 = vdwg.mxu0
        %v1535 = vmul.f32 %v1530, 0.25
        %v1536 = vadd.f32 %v1535, %v1309
        %v1537 = vsel %vm1312, %v1536, -inf
        %1538 = vmax.xlane.f32.xlu0 %v1537
        %v1539 = vpop.xlane.xlu0 %1538
        %v1540 = vsub.f32 %v1536, %v1539
        %v1541 = vmul.f32 %v1540, 1.442695
        %v1542 = vpow.pop %v1541
        %v1543 = vsel %vm1312, %v1542, 0.0
        %1544 = vadd.xlane.f32.xlu0 %v1543
        %v1545 = vpop.xlane.xlu0 %1544
        %v1546 = vrcp.pop %v1545
        %v1547 = vmul.f32 %v1542, %v1546
        %v1548 = vpack.c.bf16 %v1547, %v1547
        %1549 = vrot.lane.b32.xlu0 %v1253, 96
        %v1550 = vpop.permute.xlu0 %1549
        %v1552 = vsel %vm1312, %v1548, 0
        %v1555 = vsel %vm1328, %v1550, 0
        %1557 = vmatprep.subr.bf16.mxu0 0
        %1558 = vmatpush1.bf16.msra.mxu0 0
        %1559 = vmatprep.subr.bf16.mxu0 0
        %1560 = vmatpush1.bf16.msra.mxu0 0
        %1561 = vmatprep.subr.bf16.mxu0 0
        %1562 = vmatpush1.bf16.msra.mxu0 0
        %1563 = vmatprep.subr.bf16.mxu0 0
        %1564 = vmatpush1.bf16.msra.mxu0 0
        %1565 = vmatprep.subr.bf16.mxu0 0
        %1566 = vmatpush1.bf16.msra.mxu0 0
        %1567 = vmatprep.subr.bf16.mxu0 0
        %1568 = vmatpush1.bf16.msra.mxu0 0
        %1569 = vmatprep.subr.bf16.mxu0 0
        %1570 = vmatpush1.bf16.msra.mxu0 0
        %1571 = vmatprep.subr.bf16.mxu0 0
        %1572 = vmatpush1.bf16.msra.mxu0 %v1555
        %1573 = vmatprep.subr.bf16.mxu0 0
        %1574 = vmatpush2.bf16.msra.mxu0 0
        %1575 = vmatprep.subr.bf16.mxu0 0
        %1576 = vmatpush2.bf16.msra.mxu0 0
        %1577 = vmatprep.subr.bf16.mxu0 0
        %1578 = vmatpush2.bf16.msra.mxu0 0
        %1579 = vmatprep.subr.bf16.mxu0 0
        %1580 = vmatpush2.bf16.msra.mxu0 0
        %1581 = vmatprep.subr.bf16.mxu0 0
        %1582 = vmatpush2.bf16.msra.mxu0 0
        %1583 = vmatprep.subr.bf16.mxu0 0
        %1584 = vmatpush2.bf16.msra.mxu0 0
        %1585 = vmatprep.subr.bf16.mxu0 0
        %1586 = vmatpush2.bf16.msra.mxu0 0
        %1587 = vmatprep.subr.bf16.mxu0 0
        %1588 = vmatpush2.bf16.msra.mxu0 0
        %1589 = vmatprep.mubr.bf16.mxu0 0
        %1590 = vmatmul.mubr.bf16.gmra.mxu0 %v1552
        %v1591 = vpop.f32.mrf.mxu0
        %v1592 = vadd.f32 0.0, %v1591
        %v1593 = vpop.f32.mrf.mxu0
        %v1594 = vpop.f32.mrf.mxu0
        %v1595 = vpop.f32.mrf.mxu0
        %1596 = vdwg.mxu0
        %1597 = vrot.lane.b32.xlu0 %v1252, 80
        %v1598 = vpop.permute.xlu0 %1597
        %1599 = vrot.lane.b32.xlu0 %v1252, 16
        %v1600 = vpop.permute.xlu0 %1599
        %v1602 = vsel %vm1257, %v1598, 0
        %v1605 = vsel %vm1257, %v1600, 0
        %1607 = vmatprep.subr.bf16.mxu0 0
        %1608 = vmatpush1.bf16.xpose.msra.mxu0 0
        %1609 = vmatprep.subr.bf16.mxu0 0
        %1610 = vmatpush1.bf16.xpose.msra.mxu0 0
        %1611 = vmatprep.subr.bf16.mxu0 0
        %1612 = vmatpush1.bf16.xpose.msra.mxu0 0
        %1613 = vmatprep.subr.bf16.mxu0 0
        %1614 = vmatpush1.bf16.xpose.msra.mxu0 0
        %1615 = vmatprep.subr.bf16.mxu0 0
        %1616 = vmatpush1.bf16.xpose.msra.mxu0 0
        %1617 = vmatprep.subr.bf16.mxu0 0
        %1618 = vmatpush1.bf16.xpose.msra.mxu0 0
        %1619 = vmatprep.subr.bf16.mxu0 0
        %1620 = vmatpush1.bf16.xpose.msra.mxu0 0
        %1621 = vmatprep.subr.bf16.mxu0 0
        %1622 = vmatpush1.bf16.xpose.msra.mxu0 %v1605
        %1623 = vmatprep.subr.bf16.mxu0 0
        %1624 = vmatpush2.bf16.xpose.msra.mxu0 0
        %1625 = vmatprep.subr.bf16.mxu0 0
        %1626 = vmatpush2.bf16.xpose.msra.mxu0 0
        %1627 = vmatprep.subr.bf16.mxu0 0
        %1628 = vmatpush2.bf16.xpose.msra.mxu0 0
        %1629 = vmatprep.subr.bf16.mxu0 0
        %1630 = vmatpush2.bf16.xpose.msra.mxu0 0
        %1631 = vmatprep.subr.bf16.mxu0 0
        %1632 = vmatpush2.bf16.xpose.msra.mxu0 0
        %1633 = vmatprep.subr.bf16.mxu0 0
        %1634 = vmatpush2.bf16.xpose.msra.mxu0 0
        %1635 = vmatprep.subr.bf16.mxu0 0
        %1636 = vmatpush2.bf16.xpose.msra.mxu0 0
        %1637 = vmatprep.subr.bf16.mxu0 0
        %1638 = vmatpush2.bf16.xpose.msra.mxu0 0
        %1639 = vmatprep.mubr.bf16.mxu0 0
        %1640 = vmatmul.mubr.bf16.gmra.mxu0 %v1602
        %v1641 = vpop.f32.mrf.mxu0
        %v1642 = vadd.f32 0.0, %v1641
        %v1643 = vpop.f32.mrf.mxu0
        %v1644 = vpop.f32.mrf.mxu0
        %v1645 = vpop.f32.mrf.mxu0
        %1646 = vdwg.mxu0
        %v1647 = vmul.f32 %v1642, 0.25
        %v1648 = vadd.f32 %v1647, %v1309
        %v1649 = vsel %vm1312, %v1648, -inf
        %1650 = vmax.xlane.f32.xlu0 %v1649
        %v1651 = vpop.xlane.xlu0 %1650
        %v1652 = vsub.f32 %v1648, %v1651
        %v1653 = vmul.f32 %v1652, 1.442695
        %v1654 = vpow.pop %v1653
        %v1655 = vsel %vm1312, %v1654, 0.0
        %1656 = vadd.xlane.f32.xlu0 %v1655
        %v1657 = vpop.xlane.xlu0 %1656
        %v1658 = vrcp.pop %v1657
        %v1659 = vmul.f32 %v1654, %v1658
        %v1660 = vpack.c.bf16 %v1659, %v1659
        %1661 = vrot.lane.b32.xlu0 %v1253, 80
        %v1662 = vpop.permute.xlu0 %1661
        %v1664 = vsel %vm1312, %v1660, 0
        %v1667 = vsel %vm1328, %v1662, 0
        %1669 = vmatprep.subr.bf16.mxu0 0
        %1670 = vmatpush1.bf16.msra.mxu0 0
        %1671 = vmatprep.subr.bf16.mxu0 0
        %1672 = vmatpush1.bf16.msra.mxu0 0
        %1673 = vmatprep.subr.bf16.mxu0 0
        %1674 = vmatpush1.bf16.msra.mxu0 0
        %1675 = vmatprep.subr.bf16.mxu0 0
        %1676 = vmatpush1.bf16.msra.mxu0 0
        %1677 = vmatprep.subr.bf16.mxu0 0
        %1678 = vmatpush1.bf16.msra.mxu0 0
        %1679 = vmatprep.subr.bf16.mxu0 0
        %1680 = vmatpush1.bf16.msra.mxu0 0
        %1681 = vmatprep.subr.bf16.mxu0 0
        %1682 = vmatpush1.bf16.msra.mxu0 0
        %1683 = vmatprep.subr.bf16.mxu0 0
        %1684 = vmatpush1.bf16.msra.mxu0 %v1667
        %1685 = vmatprep.subr.bf16.mxu0 0
        %1686 = vmatpush2.bf16.msra.mxu0 0
        %1687 = vmatprep.subr.bf16.mxu0 0
        %1688 = vmatpush2.bf16.msra.mxu0 0
        %1689 = vmatprep.subr.bf16.mxu0 0
        %1690 = vmatpush2.bf16.msra.mxu0 0
        %1691 = vmatprep.subr.bf16.mxu0 0
        %1692 = vmatpush2.bf16.msra.mxu0 0
        %1693 = vmatprep.subr.bf16.mxu0 0
        %1694 = vmatpush2.bf16.msra.mxu0 0
        %1695 = vmatprep.subr.bf16.mxu0 0
        %1696 = vmatpush2.bf16.msra.mxu0 0
        %1697 = vmatprep.subr.bf16.mxu0 0
        %1698 = vmatpush2.bf16.msra.mxu0 0
        %1699 = vmatprep.subr.bf16.mxu0 0
        %1700 = vmatpush2.bf16.msra.mxu0 0
        %1701 = vmatprep.mubr.bf16.mxu0 0
        %1702 = vmatmul.mubr.bf16.gmra.mxu0 %v1664
        %v1703 = vpop.f32.mrf.mxu0
        %v1704 = vadd.f32 0.0, %v1703
        %v1705 = vpop.f32.mrf.mxu0
        %v1706 = vpop.f32.mrf.mxu0
        %v1707 = vpop.f32.mrf.mxu0
        %1708 = vdwg.mxu0
        %1710 = vrot.lane.b32.xlu0 %v1480, 16
        %v1711 = vpop.permute.xlu0 %1710
        %1714 = vrot.lane.b32.xlu0 %v1592, 32
        %v1715 = vpop.permute.xlu0 %1714
        %1718 = vrot.lane.b32.xlu0 %v1704, 48
        %v1719 = vpop.permute.xlu0 %1718
        %v1721 = vsel %vm1257, %v1367, %v1711
        %vm1722 = vcmask 261120
        %v1723 = vsel %vm1722, %v1721, %v1715
        %vm1724 = vcmask 392192
        %v1725 = vsel %vm1724, %v1723, %v1719
        %v1726 = vpack.c.bf16 %v1725, %v1725
        %v1727 = vld [vmem:[%s1098] sm:$0xf]
        %v1728 = vld [vmem:[%s1098 + $0x4] sm:$0xf]
        %v1729 = vld [vmem:[%s1098 + $0x8] sm:$0xf]
        %v1730 = vld [vmem:[%s1098 + $0xc] sm:$0xf]
        %v1731 = vld [vmem:[%s1098 + $0x10] sm:$0xf]
        %v1732 = vld [vmem:[%s1098 + $0x14] sm:$0xf]
        %v1733 = vld [vmem:[%s1098 + $0x18] sm:$0xf]
        %v1734 = vld [vmem:[%s1098 + $0x1c] sm:$0xf]
        %v1735 = vld [vmem:[%s906] sm:$0x1]
        %v1737 = vlaneseq
        %v1738 = vshrl.u32 %v1737, 7
        %v1739 = vsub.s32 0, %v1738
        %v1740 = vrot.slane %v1735, %v1739
        %v1750 = vunpack.c.l.b16 %v1727
        %v1751 = vunpack.c.l.b16 %v1728
        %v1752 = vunpack.c.l.b16 %v1729
        %v1753 = vunpack.c.l.b16 %v1730
        %v1754 = vunpack.c.l.b16 %v1731
        %v1755 = vunpack.c.l.b16 %v1732
        %v1756 = vunpack.c.l.b16 %v1733
        %v1757 = vunpack.c.l.b16 %v1734
        %v1758 = vpack.c.b16 %v1751, %v1750
        %v1759 = vpack.c.b16 %v1753, %v1752
        %v1760 = vpack.c.b16 %v1755, %v1754
        %v1761 = vpack.c.b16 %v1757, %v1756
        %v1767 = vsel %vm1207, %v1726, 0
        %1769 = vmatprep.subr.bf16.mxu0 0
        %1770 = vmatpush1.bf16.msra.mxu0 0
        %1771 = vmatprep.subr.bf16.mxu0 0
        %1772 = vmatpush1.bf16.msra.mxu0 0
        %1773 = vmatprep.subr.bf16.mxu0 0
        %1774 = vmatpush1.bf16.msra.mxu0 0
        %1775 = vmatprep.subr.bf16.mxu0 0
        %1776 = vmatpush1.bf16.msra.mxu0 0
        %1777 = vmatprep.subr.bf16.mxu0 0
        %1778 = vmatpush1.bf16.msra.mxu0 %v1761
        %1779 = vmatprep.subr.bf16.mxu0 0
        %1780 = vmatpush1.bf16.msra.mxu0 %v1760
        %1781 = vmatprep.subr.bf16.mxu0 0
        %1782 = vmatpush1.bf16.msra.mxu0 %v1759
        %1783 = vmatprep.subr.bf16.mxu0 0
        %1784 = vmatpush1.bf16.msra.mxu0 %v1758
        %1785 = vmatprep.subr.bf16.mxu0 0
        %1786 = vmatpush2.bf16.msra.mxu0 0
        %1787 = vmatprep.subr.bf16.mxu0 0
        %1788 = vmatpush2.bf16.msra.mxu0 0
        %1789 = vmatprep.subr.bf16.mxu0 0
        %1790 = vmatpush2.bf16.msra.mxu0 0
        %1791 = vmatprep.subr.bf16.mxu0 0
        %1792 = vmatpush2.bf16.msra.mxu0 0
        %1793 = vmatprep.subr.bf16.mxu0 0
        %1794 = vmatpush2.bf16.msra.mxu0 0
        %1795 = vmatprep.subr.bf16.mxu0 0
        %1796 = vmatpush2.bf16.msra.mxu0 0
        %1797 = vmatprep.subr.bf16.mxu0 0
        %1798 = vmatpush2.bf16.msra.mxu0 0
        %1799 = vmatprep.subr.bf16.mxu0 0
        %1800 = vmatpush2.bf16.msra.mxu0 0
        %1801 = vmatprep.mubr.bf16.mxu0 0
        %1802 = vmatmul.mubr.bf16.gmra.mxu0 %v1767
        %v1803 = vpop.f32.mrf.mxu0
        %v1804 = vadd.f32 %v1740, %v1803
        %v1805 = vpop.f32.mrf.mxu0
        %v1806 = vpop.f32.mrf.mxu0
        %v1807 = vpop.f32.mrf.mxu0
        %1808 = vdwg.mxu0
        %v1809 = vadd.f32 %v1804, %v1145
        %v1810 = vld [vmem:[%s914] sm:$0x1]
        %v1811 = vld [vmem:[%s922] sm:$0x1]
        %v1812 = vsel %vm1207, %v1809, 0.0
        %1813 = vadd.xlane.f32.xlu0 %v1812
        %v1814 = vpop.xlane.xlu0 %1813
        %v1815 = vrcp.pop 64.0
        %v1816 = vmul.f32 %v1814, %v1815
        %v1817 = vsub.f32 %v1809, %v1816
        %v1818 = vmul.f32 %v1817, %v1817
        %v1819 = vsel %vm1207, %v1818, 0.0
        %1820 = vadd.xlane.f32.xlu0 %v1819
        %v1821 = vpop.xlane.xlu0 %1820
        %v1822 = vmul.f32 %v1821, %v1815
        %v1823 = vadd.f32 %v1822, 1e-12
        %v1824 = vrsqrt.pop %v1823
        %v1825 = vmul.f32 %v1817, %v1824
        %v1827 = vlaneseq
        %v1828 = vshrl.u32 %v1827, 7
        %v1829 = vsub.s32 0, %v1828
        %v1830 = vrot.slane %v1810, %v1829
        %v1832 = vmul.f32 %v1825, %v1830
        %v1834 = vlaneseq
        %v1835 = vshrl.u32 %v1834, 7
        %v1836 = vsub.s32 0, %v1835
        %v1837 = vrot.slane %v1811, %v1836
        %v1839 = vadd.f32 %v1832, %v1837
        %v1840 = vpack.c.bf16 %v1839, %v1839
        %v1841 = vld [vmem:[%s931] sm:$0xf]
        %v1842 = vld [vmem:[%s931 + $0x4] sm:$0xf]
        %v1843 = vld [vmem:[%s931 + $0x8] sm:$0xf]
        %v1844 = vld [vmem:[%s931 + $0xc] sm:$0xf]
        %v1845 = vld [vmem:[%s931 + $0x10] sm:$0xf]
        %v1846 = vld [vmem:[%s931 + $0x14] sm:$0xf]
        %v1847 = vld [vmem:[%s931 + $0x18] sm:$0xf]
        %v1848 = vld [vmem:[%s931 + $0x1c] sm:$0xf]
        %v1849 = vld [vmem:[%s939] sm:$0x1]
        %v1851 = vlaneseq
        %v1852 = vshrl.u32 %v1851, 7
        %v1853 = vsub.s32 0, %v1852
        %v1854 = vrot.slane %v1849, %v1853
        %v1864 = vunpack.c.l.b16 %v1841
        %v1865 = vunpack.c.l.b16 %v1842
        %v1866 = vunpack.c.l.b16 %v1843
        %v1867 = vunpack.c.l.b16 %v1844
        %v1868 = vunpack.c.l.b16 %v1845
        %v1869 = vunpack.c.l.b16 %v1846
        %v1870 = vunpack.c.l.b16 %v1847
        %v1871 = vunpack.c.l.b16 %v1848
        %v1872 = vpack.c.b16 %v1865, %v1864
        %v1873 = vpack.c.b16 %v1867, %v1866
        %v1874 = vpack.c.b16 %v1869, %v1868
        %v1875 = vpack.c.b16 %v1871, %v1870
        %v1881 = vsel %vm1207, %v1840, 0
        %1883 = vmatprep.subr.bf16.mxu0 0
        %1884 = vmatpush1.bf16.msra.mxu0 0
        %1885 = vmatprep.subr.bf16.mxu0 0
        %1886 = vmatpush1.bf16.msra.mxu0 0
        %1887 = vmatprep.subr.bf16.mxu0 0
        %1888 = vmatpush1.bf16.msra.mxu0 0
        %1889 = vmatprep.subr.bf16.mxu0 0
        %1890 = vmatpush1.bf16.msra.mxu0 0
        %1891 = vmatprep.subr.bf16.mxu0 0
        %1892 = vmatpush1.bf16.msra.mxu0 %v1875
        %1893 = vmatprep.subr.bf16.mxu0 0
        %1894 = vmatpush1.bf16.msra.mxu0 %v1874
        %1895 = vmatprep.subr.bf16.mxu0 0
        %1896 = vmatpush1.bf16.msra.mxu0 %v1873
        %1897 = vmatprep.subr.bf16.mxu0 0
        %1898 = vmatpush1.bf16.msra.mxu0 %v1872
        %1899 = vmatprep.subr.bf16.mxu0 0
        %1900 = vmatpush2.bf16.msra.mxu0 0
        %1901 = vmatprep.subr.bf16.mxu0 0
        %1902 = vmatpush2.bf16.msra.mxu0 0
        %1903 = vmatprep.subr.bf16.mxu0 0
        %1904 = vmatpush2.bf16.msra.mxu0 0
        %1905 = vmatprep.subr.bf16.mxu0 0
        %1906 = vmatpush2.bf16.msra.mxu0 0
        %1907 = vmatprep.subr.bf16.mxu0 0
        %1908 = vmatpush2.bf16.msra.mxu0 0
        %1909 = vmatprep.subr.bf16.mxu0 0
        %1910 = vmatpush2.bf16.msra.mxu0 0
        %1911 = vmatprep.subr.bf16.mxu0 0
        %1912 = vmatpush2.bf16.msra.mxu0 0
        %1913 = vmatprep.subr.bf16.mxu0 0
        %1914 = vmatpush2.bf16.msra.mxu0 0
        %1915 = vmatprep.mubr.bf16.mxu0 0
        %1916 = vmatmul.mubr.bf16.gmra.mxu0 %v1881
        %v1917 = vpop.f32.mrf.mxu0
        %v1918 = vadd.f32 %v1854, %v1917
        %v1919 = vpop.f32.mrf.mxu0
        %v1920 = vpop.f32.mrf.mxu0
        %v1921 = vpop.f32.mrf.mxu0
        %1922 = vdwg.mxu0
        %v1923 = vmul.f32 %v1918, 0.5
        %v1924 = vmul.f32 %v1918, 0.044715
        %v1925 = vmul.f32 %v1924, %v1918
        %v1926 = vmul.f32 %v1925, %v1918
        %v1927 = vadd.f32 %v1918, %v1926
        %v1928 = vmul.f32 %v1927, 0.7978846
        %v1929 = vtanh.pop %v1928
        %v1930 = vadd.f32 %v1929, 1.0
        %v1931 = vmul.f32 %v1923, %v1930
        %v1932 = vpack.c.bf16 %v1931, %v1931
        %v1933 = vld [vmem:[%s1103] sm:$0xf]
        %v1934 = vld [vmem:[%s1103 + $0x4] sm:$0xf]
        %v1935 = vld [vmem:[%s1103 + $0x8] sm:$0xf]
        %v1936 = vld [vmem:[%s1103 + $0xc] sm:$0xf]
        %v1937 = vld [vmem:[%s1103 + $0x10] sm:$0xf]
        %v1938 = vld [vmem:[%s1103 + $0x14] sm:$0xf]
        %v1939 = vld [vmem:[%s1103 + $0x18] sm:$0xf]
        %v1940 = vld [vmem:[%s1103 + $0x1c] sm:$0xf]
        %v1941 = vld [vmem:[%s1103 + $0x20] sm:$0xf]
        %v1942 = vld [vmem:[%s1103 + $0x24] sm:$0xf]
        %v1943 = vld [vmem:[%s1103 + $0x28] sm:$0xf]
        %v1944 = vld [vmem:[%s1103 + $0x2c] sm:$0xf]
        %v1945 = vld [vmem:[%s1103 + $0x30] sm:$0xf]
        %v1946 = vld [vmem:[%s1103 + $0x34] sm:$0xf]
        %v1947 = vld [vmem:[%s1103 + $0x38] sm:$0xf]
        %v1948 = vld [vmem:[%s1103 + $0x3c] sm:$0xf]
        %v1949 = vld [vmem:[%s947] sm:$0x1]
        %v1951 = vlaneseq
        %v1952 = vshrl.u32 %v1951, 7
        %v1953 = vsub.s32 0, %v1952
        %v1954 = vrot.slane %v1949, %v1953
        %v1972 = vunpack.c.l.b16 %v1933
        %v1973 = vunpack.c.l.b16 %v1934
        %v1974 = vunpack.c.l.b16 %v1935
        %v1975 = vunpack.c.l.b16 %v1936
        %v1976 = vunpack.c.l.b16 %v1937
        %v1977 = vunpack.c.l.b16 %v1938
        %v1978 = vunpack.c.l.b16 %v1939
        %v1979 = vunpack.c.l.b16 %v1940
        %v1980 = vunpack.c.l.b16 %v1941
        %v1981 = vunpack.c.l.b16 %v1942
        %v1982 = vunpack.c.l.b16 %v1943
        %v1983 = vunpack.c.l.b16 %v1944
        %v1984 = vunpack.c.l.b16 %v1945
        %v1985 = vunpack.c.l.b16 %v1946
        %v1986 = vunpack.c.l.b16 %v1947
        %v1987 = vunpack.c.l.b16 %v1948
        %v1988 = vpack.c.b16 %v1973, %v1972
        %v1989 = vpack.c.b16 %v1975, %v1974
        %v1990 = vpack.c.b16 %v1977, %v1976
        %v1991 = vpack.c.b16 %v1979, %v1978
        %v1992 = vpack.c.b16 %v1981, %v1980
        %v1993 = vpack.c.b16 %v1983, %v1982
        %v1994 = vpack.c.b16 %v1985, %v1984
        %v1995 = vpack.c.b16 %v1987, %v1986
        %2004 = vmatprep.subr.bf16.mxu0 0
        %2005 = vmatpush1.bf16.msra.mxu0 %v1995
        %2006 = vmatprep.subr.bf16.mxu0 0
        %2007 = vmatpush1.bf16.msra.mxu0 %v1994
        %2008 = vmatprep.subr.bf16.mxu0 0
        %2009 = vmatpush1.bf16.msra.mxu0 %v1993
        %2010 = vmatprep.subr.bf16.mxu0 0
        %2011 = vmatpush1.bf16.msra.mxu0 %v1992
        %2012 = vmatprep.subr.bf16.mxu0 0
        %2013 = vmatpush1.bf16.msra.mxu0 %v1991
        %2014 = vmatprep.subr.bf16.mxu0 0
        %2015 = vmatpush1.bf16.msra.mxu0 %v1990
        %2016 = vmatprep.subr.bf16.mxu0 0
        %2017 = vmatpush1.bf16.msra.mxu0 %v1989
        %2018 = vmatprep.subr.bf16.mxu0 0
        %2019 = vmatpush1.bf16.msra.mxu0 %v1988
        %2020 = vmatprep.subr.bf16.mxu0 0
        %2021 = vmatpush2.bf16.msra.mxu0 0
        %2022 = vmatprep.subr.bf16.mxu0 0
        %2023 = vmatpush2.bf16.msra.mxu0 0
        %2024 = vmatprep.subr.bf16.mxu0 0
        %2025 = vmatpush2.bf16.msra.mxu0 0
        %2026 = vmatprep.subr.bf16.mxu0 0
        %2027 = vmatpush2.bf16.msra.mxu0 0
        %2028 = vmatprep.subr.bf16.mxu0 0
        %2029 = vmatpush2.bf16.msra.mxu0 0
        %2030 = vmatprep.subr.bf16.mxu0 0
        %2031 = vmatpush2.bf16.msra.mxu0 0
        %2032 = vmatprep.subr.bf16.mxu0 0
        %2033 = vmatpush2.bf16.msra.mxu0 0
        %2034 = vmatprep.subr.bf16.mxu0 0
        %2035 = vmatpush2.bf16.msra.mxu0 0
        %2036 = vmatprep.mubr.bf16.mxu0 0
        %2037 = vmatmul.mubr.bf16.gmra.mxu0 %v1932
        %v2038 = vpop.f32.mrf.mxu0
        %v2039 = vadd.f32 %v1954, %v2038
        %v2040 = vpop.f32.mrf.mxu0
        %v2041 = vpop.f32.mrf.mxu0
        %v2042 = vpop.f32.mrf.mxu0
        %2043 = vdwg.mxu0
        %v2044 = vadd.f32 %v2039, %v1839
        %v2045 = vld [vmem:[%s955] sm:$0x1]
        %v2046 = vld [vmem:[%s963] sm:$0x1]
        %v2047 = vsel %vm1207, %v2044, 0.0
        %2048 = vadd.xlane.f32.xlu0 %v2047
        %v2049 = vpop.xlane.xlu0 %2048
        %v2050 = vmul.f32 %v2049, %v1815
        %v2051 = vsub.f32 %v2044, %v2050
        %v2052 = vmul.f32 %v2051, %v2051
        %v2053 = vsel %vm1207, %v2052, 0.0
        %2054 = vadd.xlane.f32.xlu0 %v2053
        %v2055 = vpop.xlane.xlu0 %2054
        %v2056 = vmul.f32 %v2055, %v1815
        %v2057 = vadd.f32 %v2056, 1e-12
        %v2058 = vrsqrt.pop %v2057
        %v2059 = vmul.f32 %v2051, %v2058
        %v2061 = vlaneseq
        %v2062 = vshrl.u32 %v2061, 7
        %v2063 = vsub.s32 0, %v2062
        %v2064 = vrot.slane %v2045, %v2063
        %v2066 = vmul.f32 %v2059, %v2064
        %v2068 = vlaneseq
        %v2069 = vshrl.u32 %v2068, 7
        %v2070 = vsub.s32 0, %v2069
        %v2071 = vrot.slane %v2046, %v2070
        %v2073 = vadd.f32 %v2066, %v2071
        %v2074 = vpack.c.bf16 %v2073, %v2073
        %vm2075 = vcmask 519168
        %2076 = vst.msk [vmem:[#allocation2] sm:$0xf] %vm2075, %v2074
        %p2077 = scmp.eq.s32.totalorder %s47, 1
        // Predicated region
        $region169: #{tpu_custom_call.1} parent=99 // pred_check
          %p2078 = pneg %p2077
        $region170: #{tpu_custom_call.1} parent=99 // pred_check_branch
          %2080 = sbr.rel (%p2078) target = $region172
        $region171: #{tpu_custom_call.1} parent=99 // pred_region
          %v2081 = vld [vmem:[#allocation20] sm:$0xf]
          %v2082 = vld [vmem:[#allocation20 + $0x4] sm:$0xf]
          %v2083 = vld [vmem:[#allocation20 + $0x8] sm:$0xf]
          %v2084 = vld [vmem:[#allocation20 + $0xc] sm:$0xf]
          %v2085 = vld [vmem:[#allocation20 + $0x10] sm:$0xf]
          %v2086 = vld [vmem:[#allocation20 + $0x14] sm:$0xf]
          %v2087 = vld [vmem:[#allocation20 + $0x18] sm:$0xf]
          %v2088 = vld [vmem:[#allocation20 + $0x1c] sm:$0xf]
          %v2089 = vld [vmem:[#allocation21] sm:$0x1]
          %v2098 = vunpack.c.l.b16 %v2081
          %v2099 = vunpack.c.l.b16 %v2082
          %v2100 = vunpack.c.l.b16 %v2083
          %v2101 = vunpack.c.l.b16 %v2084
          %v2102 = vunpack.c.l.b16 %v2085
          %v2103 = vunpack.c.l.b16 %v2086
          %v2104 = vunpack.c.l.b16 %v2087
          %v2105 = vunpack.c.l.b16 %v2088
          %v2106 = vpack.c.b16 %v2099, %v2098
          %v2107 = vpack.c.b16 %v2101, %v2100
          %v2108 = vpack.c.b16 %v2103, %v2102
          %v2109 = vpack.c.b16 %v2105, %v2104
          %v2115 = vsel %vm1207, %v2074, 0
          %2117 = vmatprep.subr.bf16.mxu0 0
          %2118 = vmatpush1.bf16.msra.mxu0 0
          %2119 = vmatprep.subr.bf16.mxu0 0
          %2120 = vmatpush1.bf16.msra.mxu0 0
          %2121 = vmatprep.subr.bf16.mxu0 0
          %2122 = vmatpush1.bf16.msra.mxu0 0
          %2123 = vmatprep.subr.bf16.mxu0 0
          %2124 = vmatpush1.bf16.msra.mxu0 0
          %2125 = vmatprep.subr.bf16.mxu0 0
          %2126 = vmatpush1.bf16.msra.mxu0 %v2109
          %2127 = vmatprep.subr.bf16.mxu0 0
          %2128 = vmatpush1.bf16.msra.mxu0 %v2108
          %2129 = vmatprep.subr.bf16.mxu0 0
          %2130 = vmatpush1.bf16.msra.mxu0 %v2107
          %2131 = vmatprep.subr.bf16.mxu0 0
          %2132 = vmatpush1.bf16.msra.mxu0 %v2106
          %2133 = vmatprep.subr.bf16.mxu0 0
          %2134 = vmatpush2.bf16.msra.mxu0 0
          %2135 = vmatprep.subr.bf16.mxu0 0
          %2136 = vmatpush2.bf16.msra.mxu0 0
          %2137 = vmatprep.subr.bf16.mxu0 0
          %2138 = vmatpush2.bf16.msra.mxu0 0
          %2139 = vmatprep.subr.bf16.mxu0 0
          %2140 = vmatpush2.bf16.msra.mxu0 0
          %2141 = vmatprep.subr.bf16.mxu0 0
          %2142 = vmatpush2.bf16.msra.mxu0 0
          %2143 = vmatprep.subr.bf16.mxu0 0
          %2144 = vmatpush2.bf16.msra.mxu0 0
          %2145 = vmatprep.subr.bf16.mxu0 0
          %2146 = vmatpush2.bf16.msra.mxu0 0
          %2147 = vmatprep.subr.bf16.mxu0 0
          %2148 = vmatpush2.bf16.msra.mxu0 0
          %2149 = vmatprep.mubr.bf16.mxu0 0
          %2150 = vmatmul.mubr.bf16.gmra.mxu0 %v2115
          %v2151 = vpop.f32.mrf.mxu0
          %v2152 = vadd.f32 %v2089, %v2151
          %v2153 = vpop.f32.mrf.mxu0
          %v2154 = vpop.f32.mrf.mxu0
          %v2155 = vpop.f32.mrf.mxu0
          %2156 = vdwg.mxu0
          %v2157 = vtanh.pop %v2152
          %v2158 = vld [vmem:[%s18] sm:$0xf]
          %v2159 = vld [vmem:[%s18 + $0x4] sm:$0xf]
          %v2160 = vld [vmem:[%s18 + $0x8] sm:$0xf]
          %v2161 = vld [vmem:[%s18 + $0xc] sm:$0xf]
          %v2162 = vld [vmem:[%s18 + $0x10] sm:$0xf]
          %v2163 = vld [vmem:[%s18 + $0x14] sm:$0xf]
          %v2164 = vld [vmem:[%s18 + $0x18] sm:$0xf]
          %v2165 = vld [vmem:[%s18 + $0x1c] sm:$0xf]
          %v2166 = vpack.c.bf16 %v2157, %v2157
          %v2167 = vld [vmem:[#allocation22] sm:$0x1]
          %v2176 = vunpack.c.l.b16 %v2158
          %v2177 = vunpack.c.l.b16 %v2159
          %v2178 = vunpack.c.l.b16 %v2160
          %v2179 = vunpack.c.l.b16 %v2161
          %v2180 = vunpack.c.l.b16 %v2162
          %v2181 = vunpack.c.l.b16 %v2163
          %v2182 = vunpack.c.l.b16 %v2164
          %v2183 = vunpack.c.l.b16 %v2165
          %v2184 = vpack.c.b16 %v2177, %v2176
          %v2185 = vpack.c.b16 %v2179, %v2178
          %v2186 = vpack.c.b16 %v2181, %v2180
          %v2187 = vpack.c.b16 %v2183, %v2182
          %v2193 = vsel %vm1207, %v2166, 0
          %2195 = vmatprep.subr.bf16.mxu0 0
          %2196 = vmatpush1.bf16.msra.mxu0 0
          %2197 = vmatprep.subr.bf16.mxu0 0
          %2198 = vmatpush1.bf16.msra.mxu0 0
          %2199 = vmatprep.subr.bf16.mxu0 0
          %2200 = vmatpush1.bf16.msra.mxu0 0
          %2201 = vmatprep.subr.bf16.mxu0 0
          %2202 = vmatpush1.bf16.msra.mxu0 0
          %2203 = vmatprep.subr.bf16.mxu0 0
          %2204 = vmatpush1.bf16.msra.mxu0 %v2187
          %2205 = vmatprep.subr.bf16.mxu0 0
          %2206 = vmatpush1.bf16.msra.mxu0 %v2186
          %2207 = vmatprep.subr.bf16.mxu0 0
          %2208 = vmatpush1.bf16.msra.mxu0 %v2185
          %2209 = vmatprep.subr.bf16.mxu0 0
          %2210 = vmatpush1.bf16.msra.mxu0 %v2184
          %2211 = vmatprep.subr.bf16.mxu0 0
          %2212 = vmatpush2.bf16.msra.mxu0 0
          %2213 = vmatprep.subr.bf16.mxu0 0
          %2214 = vmatpush2.bf16.msra.mxu0 0
          %2215 = vmatprep.subr.bf16.mxu0 0
          %2216 = vmatpush2.bf16.msra.mxu0 0
          %2217 = vmatprep.subr.bf16.mxu0 0
          %2218 = vmatpush2.bf16.msra.mxu0 0
          %2219 = vmatprep.subr.bf16.mxu0 0
          %2220 = vmatpush2.bf16.msra.mxu0 0
          %2221 = vmatprep.subr.bf16.mxu0 0
          %2222 = vmatpush2.bf16.msra.mxu0 0
          %2223 = vmatprep.subr.bf16.mxu0 0
          %2224 = vmatpush2.bf16.msra.mxu0 0
          %2225 = vmatprep.subr.bf16.mxu0 0
          %2226 = vmatpush2.bf16.msra.mxu0 0
          %2227 = vmatprep.mubr.bf16.mxu0 0
          %2228 = vmatmul.mubr.bf16.gmra.mxu0 %v2193
          %v2229 = vpop.f32.mrf.mxu0
          %v2230 = vadd.f32 %v2167, %v2229
          %v2231 = vpop.f32.mrf.mxu0
          %v2232 = vpop.f32.mrf.mxu0
          %v2233 = vpop.f32.mrf.mxu0
          %2234 = vdwg.mxu0
          %v2235 = vlaneseq
          %v2236 = vshrl.u32 %v2235, 7
          %v2237 = vsub.s32 0, %v2236
          %v2238 = vrot.slane %v2230, %v2237
          %2239 = vst [vmem:[%s1088] sm:$0xff] %v2238
        $region172: #{tpu_custom_call.1} parent=99 // pred_fallthru
          _
        %s2240 = sand.u32 %s552, 1
        %s2241 = scalar_lea.sflag [#allocation5], %s2240
        %s2242 = sand.u32 %s552, 1
        %s2243 = smul.addr %s2242, 8
        %s2244 = scalar_lea.vmem [#allocation24], %s2243
        // Predicated region
        $region173: #{tpu_custom_call.1} parent=99 // pred_check
          %p2245 = pneg %p562
        $region174: #{tpu_custom_call.1} parent=99 // pred_check_branch
          %2247 = sbr.rel (%p2245) target = $region176
        $region175: #{tpu_custom_call.1} parent=99 // pred_region
          %s2249 = ssub.s32 128, 128
          %2250 = vsyncadd %s2241, %s2249
          %s2251 = smul.addr %s46, 128
          %s2252 = scalar_lea.hbm %s20, %s2251
          %s2254 = sshll.u32 %s2244, 4
          %s2255 = int_to_ptr.vmem [resolvable:$true] %s2254
          %2257 = dma.vmem_to_hbm [thread:$0]  %s2255, 128, %s2252, %s2241
        $region176: #{tpu_custom_call.1} parent=99 // pred_fallthru
          _
      $region100: #{tpu_custom_call.1} parent=5 // pred_fallthru
        _
      %p2258 = scmp.le.s32.totalorder 2, %s37
      // Predicated region
      $region177: #{tpu_custom_call.1} parent=5 // pred_check
        %p2259 = pneg %p2258
      $region178: #{tpu_custom_call.1} parent=5 // pred_check_branch
        %2261 = sbr.rel (%p2259) target = $region180
      $region179: #{tpu_custom_call.1} parent=5 // pred_region
        %s2262 = ssub.s32 %s37, 2
        // Predicated region
        $region181: #{tpu_custom_call.1} parent=179 // pred_check
          %p2263 = pneg %p568
        $region182: #{tpu_custom_call.1} parent=179 // pred_check_branch
          %2265 = sbr.rel (%p2263) target = $region184
        $region183: #{tpu_custom_call.1} parent=179 // pred_region
          %s2266 = sand.u32 %s553, 1
          %s2267 = scalar_lea.sflag [#allocation5], %s2266
          %s2268 = sand.u32 %s553, 1
          %s2269 = smul.addr %s2268, 8
          %s2270 = scalar_lea.vmem [#allocation24], %s2269
          %2271 = dma.done %s2267, 128
        $region184: #{tpu_custom_call.1} parent=179 // pred_fallthru
          _
      $region180: #{tpu_custom_call.1} parent=5 // pred_fallthru
        _
    $region6: #{tpu_custom_call.1} parent=1 // loop_footer
      %s41 = sadd.s32 1, %s37
    $region7: #{tpu_custom_call.1} parent=1 // loop_footer_branch
      %36 = sbr.rel target = $region3
    $region8: #{tpu_custom_call.1} parent=1 // loop_exit
      _
    %2272 = vsyncpa [#allocation4], 1
    %s2273 = scalar_lea.sflag [#allocation4], 1
    %2274 = vsyncpa %s2273, 1
    %2275 = vsyncpa [#allocation7], 1
    %s2276 = scalar_lea.sflag [#allocation7], 1
    %2277 = vsyncpa %s2276, 1
    %2278 = vsyncpa [#allocation10], 1
    %2279 = vsyncpa [#allocation23], 1
    %2280 = vsyncpa [#allocation5], 1
    %s2281 = scalar_lea.sflag [#allocation5], 1
    %2282 = vsyncpa %s2281, 1

</llo_original>
